<compile_context>
chip_gen: v7x
topology: tpu7x:2x2x1
jax: 0.10.0
libtpu: 0.0.40
codegen_flags: <defaults>
</compile_context>

<pallas_src>
import functools

import jax
import jax.numpy as jnp
from jax import lax
from jax.experimental import pallas as pl
from jax.experimental.pallas import tpu as pltpu

K = 7                 # conv kernel size
PAD = (K - 1) // 2    # = 3


def _spatial_block_kernel(x_ref, w_ref, bn_ref, o_ref, flat_ref, *, W):
    # x_ref:    (Bt, C, HW)   VMEM input block, spatial dims flattened (lane-dense)
    # w_ref:    (2*K*K,)      SMEM conv weights, layout [c, ky, kx] row-major
    # bn_ref:   (2,)          SMEM folded BN (scale, bias)
    # o_ref:    (Bt, C, HW)   VMEM output block
    # flat_ref: (2, 1, LPAD)  VMEM scratch: zero-haloed flat pooled maps
    Bt, C, HW = x_ref.shape
    LPAD = flat_ref.shape[-1]
    inv_c = jnp.float32(1.0 / C)

    # Channel chunk size for the streaming passes (sublane-friendly).
    CH = 1
    for cand in (8, 4, 2):
        if C % cand == 0:
            CH = cand
            break
    NCH = C // CH

    # Zero the flat conv scratch once per grid step.  Only the halo [HW, LPAD)
    # must stay zero (the data region [0, HW) is fully rewritten per batch
    # element), but scratch is per-TensorCore, so gating this on
    # program_id == 0 would leave the second megacore's scratch uninitialized;
    # this buffer is only a few KiB so the per-step memset is negligible.
    flat_ref[...] = jnp.zeros(flat_ref.shape, jnp.float32)

    # Hoist scalar parameter reads out of all loops (once per grid step).
    bn_scale = bn_ref[0]
    bn_bias = bn_ref[1]
    wvals = [w_ref[i] for i in range(2 * K * K)]

    # Flat column index (p mod W) for the horizontal conv border mask.
    col = lax.broadcasted_iota(jnp.int32, (1, LPAD), 1) % W

    def batch_body(b, carry):
        # ---- channel max / mean pool: lane-dense (CH, HW) chunks ----------
        def pool_body(j, mc):
            cmax, csum = mc
            c0 = pl.multiple_of(j * CH, CH)
            chunk = x_ref[b, pl.ds(c0, CH), :].astype(jnp.float32)
            cmax = jnp.maximum(cmax, jnp.max(chunk, axis=0, keepdims=True))
            csum = csum + jnp.sum(chunk, axis=0, keepdims=True)
            return cmax, csum

        cmax, csum = lax.fori_loop(
            0, NCH, pool_body,
            (jnp.full((1, HW), -jnp.inf, jnp.float32),
             jnp.zeros((1, HW), jnp.float32)))
        cmean = csum * inv_c

        # Write pooled maps into the zero-haloed flat scratch (only [0, HW);
        # lanes [HW, LPAD) stay zero and provide the vertical conv padding).
        flat_ref[0, :, 0:HW] = cmax
        flat_ref[1, :, 0:HW] = cmean

        # ---- 7x7 conv (2 -> 1 channel) on the flat layout ------------------
        #   y[p] = sum_{c,ky,kx} w[c,ky,kx] * comp[c, p + (ky-PAD)*W + (kx-PAD)]
        # Vertical zero padding: the circular lane roll wraps out-of-range row
        # offsets into the zero halo [HW, LPAD) (LPAD >= HW + PAD*W + PAD).
        # Horizontal zero padding: per-kx lane mask on the column index.
        comp0 = flat_ref[0, :, :]                       # (1, LPAD)
        comp1 = flat_ref[1, :, :]
        acc = jnp.zeros((1, LPAD), jnp.float32)
        for kx in range(K):
            dx = kx - PAD
            valid = jnp.logical_and(col + dx >= 0, col + dx < W)
            part = jnp.zeros((1, LPAD), jnp.float32)
            for c, comp in enumerate((comp0, comp1)):
                for ky in range(K):
                    s = (-((ky - PAD) * W + dx)) % LPAD
                    rolled = comp if s == 0 else pltpu.roll(comp, s, axis=1)
                    part = part + wvals[c * (K * K) + ky * K + kx] * rolled
            acc = acc + jnp.where(valid, part, 0.0)

        # ---- folded BN + ReLU + sigmoid -> lane-dense (1, HW) gate row -----
        y = jnp.maximum(acc * bn_scale + bn_bias, 0.0)
        gate = 1.0 / (1.0 + jnp.exp(-y))                # EUP exp + reciprocal
        scale = gate[:, 0:HW].astype(x_ref.dtype)       # gate in input dtype

        # ---- gate: lane-dense streaming multiply + full-lane stores --------
        def gate_body(j, cc):
            c0 = pl.multiple_of(j * CH, CH)
            chunk = x_ref[b, pl.ds(c0, CH), :]
            o_ref[b, pl.ds(c0, CH), :] = (chunk * scale).astype(o_ref.dtype)
            return cc

        return lax.fori_loop(0, NCH, gate_body, carry)

    lax.fori_loop(0, Bt, batch_body, 0)


def spatial_block_pallas(x, conv_w, bn_scale_bias, *, batch_block=None):
    """x: (B, C, H, W); conv_w: (2*K*K,) f32 [c,ky,kx]; bn_scale_bias: (2,) f32."""
    B, C, H, W = x.shape
    HW = H * W
    # Flat padded length: must cover the positive halo HW + PAD*W + PAD and be
    # a multiple of 128 lanes (the same zero region also absorbs the negative
    # wrap of the circular roll, since LPAD - (PAD*W + PAD) >= HW).
    LPAD = pl.cdiv(HW + PAD * W + PAD, 128) * 128

    x2 = x.reshape(B, C, HW)   # lane-dense view for the streaming passes

    if batch_block is None:
        # ~2 MiB of input per grid step: amortizes the ~0.35us/step overhead
        # while 4x (in+out double-buffered) + scratch stays well inside the
        # default scoped-VMEM limit on every generation (v5e/v6e/v7x).
        bytes_per_b = C * HW * x.dtype.itemsize
        bt = max(1, min(B, (2 << 20) // max(bytes_per_b, 1)))
        if B >= 2:                      # >= 2 grid steps so both v7x TCs work
            bt = max(1, min(bt, B // 2))
        while B % bt != 0:              # keep the grid math exact
            bt -= 1
        batch_block = bt
    assert B % batch_block == 0

    kernel = functools.partial(_spatial_block_kernel, W=W)
    grid_spec = pltpu.PrefetchScalarGridSpec(
        num_scalar_prefetch=0,
        grid=(B // batch_block,),
        in_specs=[
            pl.BlockSpec((batch_block, C, HW), lambda b: (b, 0, 0)),
            pl.BlockSpec(memory_space=pltpu.MemorySpace.SMEM),
            pl.BlockSpec(memory_space=pltpu.MemorySpace.SMEM),
        ],
        out_specs=pl.BlockSpec((batch_block, C, HW), lambda b: (b, 0, 0)),
        scratch_shapes=[pltpu.VMEM((2, 1, LPAD), jnp.float32)],
    )
    out2 = pl.pallas_call(
        kernel,
        out_shape=jax.ShapeDtypeStruct((B, C, HW), x.dtype),
        grid_spec=grid_spec,
        compiler_params=pltpu.CompilerParams(
            dimension_semantics=("parallel",)),
    )(x2, conv_w, bn_scale_bias)
    return out2.reshape(B, C, H, W)


def spatial_block_reference(x, conv_w, bn_scale_bias):
    """Pure-JAX reference (matches the PyTorch module in eval mode)."""
    cmax = jnp.max(x, axis=1, keepdims=True)
    cmean = jnp.mean(x, axis=1, keepdims=True)
    comp = jnp.concatenate([cmax, cmean], axis=1)              # (B, 2, H, W)
    w = conv_w.reshape(1, 2, K, K)
    y = lax.conv_general_dilated(
        comp, w, window_strides=(1, 1), padding=((PAD, PAD), (PAD, PAD)),
        dimension_numbers=("NCHW", "OIHW", "NCHW"))
    y = y * bn_scale_bias[0] + bn_scale_bias[1]
    y = jnp.maximum(y, 0.0)
    return x * jax.nn.sigmoid(y)


if __name__ == "__main__":
    key = jax.random.PRNGKey(0)
    kx_key, kw_key = jax.random.split(key)

    B, C, H, W = 2, 4, 16, 16
    x = jax.random.normal(kx_key, (B, C, H, W), dtype=jnp.float32)

    # Conv2d(2, 1, 7) weight, flattened to (2*7*7,) in [c, ky, kx] order.
    conv_w = jax.random.normal(kw_key, (2 * K * K,), dtype=jnp.float32) * 0.1

    # BatchNorm2d(1) eval-mode params folded into scale/bias.
    gamma, beta = jnp.float32(0.9), jnp.float32(0.05)
    run_mean, run_var, eps = jnp.float32(0.02), jnp.float32(1.3), jnp.float32(1e-5)
    bn_scale = gamma / jnp.sqrt(run_var + eps)
    bn_bias = beta - run_mean * bn_scale
    bn_scale_bias = jnp.stack([bn_scale, bn_bias])

    out = spatial_block_pallas(x, conv_w, bn_scale_bias)
    out = jax.block_until_ready(out)

    ref = spatial_block_reference(x, conv_w, bn_scale_bias)
    assert out.shape == (B, C, H, W)
    max_err = float(jnp.max(jnp.abs(out - ref)))
    assert jnp.allclose(out, ref, atol=3e-5, rtol=1e-5), max_err

    print("KERNEL_OK")
</pallas_src>

<mosaic_0001>
module attributes {stable_mosaic.version = 11 : i64} {
  func.func @_spatial_block_kernel(%arg0: i32, %arg1: memref<1x4x256xf32, #tpu.memory_space<vmem>>, %arg2: memref<98xf32, #tpu.memory_space<smem>>, %arg3: memref<2xf32, #tpu.memory_space<smem>>, %arg4: memref<1x4x256xf32, #tpu.memory_space<vmem>>, %arg5: memref<2x1x384xf32, #tpu.memory_space<vmem>>) attributes {dimension_semantics = [#tpu.dimension_semantics<parallel>], iteration_bounds = array<i64: 2>, scalar_prefetch = 0 : i64, scratch_operands = 1 : i64, tpu.core_type = #tpu.core_type<tc>, window_params = [{transform_indices = @transform_0, window_bounds = array<i64: 1, 4, 256>}, {transform_indices = @transform_1, window_bounds = array<i64: 98>}, {transform_indices = @transform_2, window_bounds = array<i64: 2>}, {transform_indices = @transform_3, window_bounds = array<i64: 1, 4, 256>}]} {
    %cst = arith.constant 0.000000e+00 : f32
    %0 = vector.broadcast %cst : f32 to vector<2x1x384xf32>
    %c0 = arith.constant 0 : index
    %c0_0 = arith.constant 0 : index
    %c0_1 = arith.constant 0 : index
    %1 = vector.load %arg5[%c0, %c0_0, %c0_1] : memref<2x1x384xf32, #tpu.memory_space<vmem>>, vector<2x1x384xf32>
    tpu.vector_store %arg5[%c0, %c0_0, %c0_1], %0 {strides = array<i32>} : memref<2x1x384xf32, #tpu.memory_space<vmem>>, vector<2x1x384xf32>,
    %c0_2 = arith.constant 0 : index
    %2 = memref.load %arg3[%c0_2] : memref<2xf32, #tpu.memory_space<smem>>
    %c1 = arith.constant 1 : index
    %3 = memref.load %arg3[%c1] : memref<2xf32, #tpu.memory_space<smem>>
    %c0_3 = arith.constant 0 : index
    %4 = memref.load %arg2[%c0_3] : memref<98xf32, #tpu.memory_space<smem>>
    %c1_4 = arith.constant 1 : index
    %5 = memref.load %arg2[%c1_4] : memref<98xf32, #tpu.memory_space<smem>>
    %c2 = arith.constant 2 : index
    %6 = memref.load %arg2[%c2] : memref<98xf32, #tpu.memory_space<smem>>
    %c3 = arith.constant 3 : index
    %7 = memref.load %arg2[%c3] : memref<98xf32, #tpu.memory_space<smem>>
    %c4 = arith.constant 4 : index
    %8 = memref.load %arg2[%c4] : memref<98xf32, #tpu.memory_space<smem>>
    %c5 = arith.constant 5 : index
    %9 = memref.load %arg2[%c5] : memref<98xf32, #tpu.memory_space<smem>>
    %c6 = arith.constant 6 : index
    %10 = memref.load %arg2[%c6] : memref<98xf32, #tpu.memory_space<smem>>
    %c7 = arith.constant 7 : index
    %11 = memref.load %arg2[%c7] : memref<98xf32, #tpu.memory_space<smem>>
    %c8 = arith.constant 8 : index
    %12 = memref.load %arg2[%c8] : memref<98xf32, #tpu.memory_space<smem>>
    %c9 = arith.constant 9 : index
    %13 = memref.load %arg2[%c9] : memref<98xf32, #tpu.memory_space<smem>>
    %c10 = arith.constant 10 : index
    %14 = memref.load %arg2[%c10] : memref<98xf32, #tpu.memory_space<smem>>
    %c11 = arith.constant 11 : index
    %15 = memref.load %arg2[%c11] : memref<98xf32, #tpu.memory_space<smem>>
    %c12 = arith.constant 12 : index
    %16 = memref.load %arg2[%c12] : memref<98xf32, #tpu.memory_space<smem>>
    %c13 = arith.constant 13 : index
    %17 = memref.load %arg2[%c13] : memref<98xf32, #tpu.memory_space<smem>>
    %c14 = arith.constant 14 : index
    %18 = memref.load %arg2[%c14] : memref<98xf32, #tpu.memory_space<smem>>
    %c15 = arith.constant 15 : index
    %19 = memref.load %arg2[%c15] : memref<98xf32, #tpu.memory_space<smem>>
    %c16 = arith.constant 16 : index
    %20 = memref.load %arg2[%c16] : memref<98xf32, #tpu.memory_space<smem>>
    %c17 = arith.constant 17 : index
    %21 = memref.load %arg2[%c17] : memref<98xf32, #tpu.memory_space<smem>>
    %c18 = arith.constant 18 : index
    %22 = memref.load %arg2[%c18] : memref<98xf32, #tpu.memory_space<smem>>
    %c19 = arith.constant 19 : index
    %23 = memref.load %arg2[%c19] : memref<98xf32, #tpu.memory_space<smem>>
    %c20 = arith.constant 20 : index
    %24 = memref.load %arg2[%c20] : memref<98xf32, #tpu.memory_space<smem>>
    %c21 = arith.constant 21 : index
    %25 = memref.load %arg2[%c21] : memref<98xf32, #tpu.memory_space<smem>>
    %c22 = arith.constant 22 : index
    %26 = memref.load %arg2[%c22] : memref<98xf32, #tpu.memory_space<smem>>
    %c23 = arith.constant 23 : index
    %27 = memref.load %arg2[%c23] : memref<98xf32, #tpu.memory_space<smem>>
    %c24 = arith.constant 24 : index
    %28 = memref.load %arg2[%c24] : memref<98xf32, #tpu.memory_space<smem>>
    %c25 = arith.constant 25 : index
    %29 = memref.load %arg2[%c25] : memref<98xf32, #tpu.memory_space<smem>>
    %c26 = arith.constant 26 : index
    %30 = memref.load %arg2[%c26] : memref<98xf32, #tpu.memory_space<smem>>
    %c27 = arith.constant 27 : index
    %31 = memref.load %arg2[%c27] : memref<98xf32, #tpu.memory_space<smem>>
    %c28 = arith.constant 28 : index
    %32 = memref.load %arg2[%c28] : memref<98xf32, #tpu.memory_space<smem>>
    %c29 = arith.constant 29 : index
    %33 = memref.load %arg2[%c29] : memref<98xf32, #tpu.memory_space<smem>>
    %c30 = arith.constant 30 : index
    %34 = memref.load %arg2[%c30] : memref<98xf32, #tpu.memory_space<smem>>
    %c31 = arith.constant 31 : index
    %35 = memref.load %arg2[%c31] : memref<98xf32, #tpu.memory_space<smem>>
    %c32 = arith.constant 32 : index
    %36 = memref.load %arg2[%c32] : memref<98xf32, #tpu.memory_space<smem>>
    %c33 = arith.constant 33 : index
    %37 = memref.load %arg2[%c33] : memref<98xf32, #tpu.memory_space<smem>>
    %c34 = arith.constant 34 : index
    %38 = memref.load %arg2[%c34] : memref<98xf32, #tpu.memory_space<smem>>
    %c35 = arith.constant 35 : index
    %39 = memref.load %arg2[%c35] : memref<98xf32, #tpu.memory_space<smem>>
    %c36 = arith.constant 36 : index
    %40 = memref.load %arg2[%c36] : memref<98xf32, #tpu.memory_space<smem>>
    %c37 = arith.constant 37 : index
    %41 = memref.load %arg2[%c37] : memref<98xf32, #tpu.memory_space<smem>>
    %c38 = arith.constant 38 : index
    %42 = memref.load %arg2[%c38] : memref<98xf32, #tpu.memory_space<smem>>
    %c39 = arith.constant 39 : index
    %43 = memref.load %arg2[%c39] : memref<98xf32, #tpu.memory_space<smem>>
    %c40 = arith.constant 40 : index
    %44 = memref.load %arg2[%c40] : memref<98xf32, #tpu.memory_space<smem>>
    %c41 = arith.constant 41 : index
    %45 = memref.load %arg2[%c41] : memref<98xf32, #tpu.memory_space<smem>>
    %c42 = arith.constant 42 : index
    %46 = memref.load %arg2[%c42] : memref<98xf32, #tpu.memory_space<smem>>
    %c43 = arith.constant 43 : index
    %47 = memref.load %arg2[%c43] : memref<98xf32, #tpu.memory_space<smem>>
    %c44 = arith.constant 44 : index
    %48 = memref.load %arg2[%c44] : memref<98xf32, #tpu.memory_space<smem>>
    %c45 = arith.constant 45 : index
    %49 = memref.load %arg2[%c45] : memref<98xf32, #tpu.memory_space<smem>>
    %c46 = arith.constant 46 : index
    %50 = memref.load %arg2[%c46] : memref<98xf32, #tpu.memory_space<smem>>
    %c47 = arith.constant 47 : index
    %51 = memref.load %arg2[%c47] : memref<98xf32, #tpu.memory_space<smem>>
    %c48 = arith.constant 48 : index
    %52 = memref.load %arg2[%c48] : memref<98xf32, #tpu.memory_space<smem>>
    %c49 = arith.constant 49 : index
    %53 = memref.load %arg2[%c49] : memref<98xf32, #tpu.memory_space<smem>>
    %c50 = arith.constant 50 : index
    %54 = memref.load %arg2[%c50] : memref<98xf32, #tpu.memory_space<smem>>
    %c51 = arith.constant 51 : index
    %55 = memref.load %arg2[%c51] : memref<98xf32, #tpu.memory_space<smem>>
    %c52 = arith.constant 52 : index
    %56 = memref.load %arg2[%c52] : memref<98xf32, #tpu.memory_space<smem>>
    %c53 = arith.constant 53 : index
    %57 = memref.load %arg2[%c53] : memref<98xf32, #tpu.memory_space<smem>>
    %c54 = arith.constant 54 : index
    %58 = memref.load %arg2[%c54] : memref<98xf32, #tpu.memory_space<smem>>
    %c55 = arith.constant 55 : index
    %59 = memref.load %arg2[%c55] : memref<98xf32, #tpu.memory_space<smem>>
    %c56 = arith.constant 56 : index
    %60 = memref.load %arg2[%c56] : memref<98xf32, #tpu.memory_space<smem>>
    %c57 = arith.constant 57 : index
    %61 = memref.load %arg2[%c57] : memref<98xf32, #tpu.memory_space<smem>>
    %c58 = arith.constant 58 : index
    %62 = memref.load %arg2[%c58] : memref<98xf32, #tpu.memory_space<smem>>
    %c59 = arith.constant 59 : index
    %63 = memref.load %arg2[%c59] : memref<98xf32, #tpu.memory_space<smem>>
    %c60 = arith.constant 60 : index
    %64 = memref.load %arg2[%c60] : memref<98xf32, #tpu.memory_space<smem>>
    %c61 = arith.constant 61 : index
    %65 = memref.load %arg2[%c61] : memref<98xf32, #tpu.memory_space<smem>>
    %c62 = arith.constant 62 : index
    %66 = memref.load %arg2[%c62] : memref<98xf32, #tpu.memory_space<smem>>
    %c63 = arith.constant 63 : index
    %67 = memref.load %arg2[%c63] : memref<98xf32, #tpu.memory_space<smem>>
    %c64 = arith.constant 64 : index
    %68 = memref.load %arg2[%c64] : memref<98xf32, #tpu.memory_space<smem>>
    %c65 = arith.constant 65 : index
    %69 = memref.load %arg2[%c65] : memref<98xf32, #tpu.memory_space<smem>>
    %c66 = arith.constant 66 : index
    %70 = memref.load %arg2[%c66] : memref<98xf32, #tpu.memory_space<smem>>
    %c67 = arith.constant 67 : index
    %71 = memref.load %arg2[%c67] : memref<98xf32, #tpu.memory_space<smem>>
    %c68 = arith.constant 68 : index
    %72 = memref.load %arg2[%c68] : memref<98xf32, #tpu.memory_space<smem>>
    %c69 = arith.constant 69 : index
    %73 = memref.load %arg2[%c69] : memref<98xf32, #tpu.memory_space<smem>>
    %c70 = arith.constant 70 : index
    %74 = memref.load %arg2[%c70] : memref<98xf32, #tpu.memory_space<smem>>
    %c71 = arith.constant 71 : index
    %75 = memref.load %arg2[%c71] : memref<98xf32, #tpu.memory_space<smem>>
    %c72 = arith.constant 72 : index
    %76 = memref.load %arg2[%c72] : memref<98xf32, #tpu.memory_space<smem>>
    %c73 = arith.constant 73 : index
    %77 = memref.load %arg2[%c73] : memref<98xf32, #tpu.memory_space<smem>>
    %c74 = arith.constant 74 : index
    %78 = memref.load %arg2[%c74] : memref<98xf32, #tpu.memory_space<smem>>
    %c75 = arith.constant 75 : index
    %79 = memref.load %arg2[%c75] : memref<98xf32, #tpu.memory_space<smem>>
    %c76 = arith.constant 76 : index
    %80 = memref.load %arg2[%c76] : memref<98xf32, #tpu.memory_space<smem>>
    %c77 = arith.constant 77 : index
    %81 = memref.load %arg2[%c77] : memref<98xf32, #tpu.memory_space<smem>>
    %c78 = arith.constant 78 : index
    %82 = memref.load %arg2[%c78] : memref<98xf32, #tpu.memory_space<smem>>
    %c79 = arith.constant 79 : index
    %83 = memref.load %arg2[%c79] : memref<98xf32, #tpu.memory_space<smem>>
    %c80 = arith.constant 80 : index
    %84 = memref.load %arg2[%c80] : memref<98xf32, #tpu.memory_space<smem>>
    %c81 = arith.constant 81 : index
    %85 = memref.load %arg2[%c81] : memref<98xf32, #tpu.memory_space<smem>>
    %c82 = arith.constant 82 : index
    %86 = memref.load %arg2[%c82] : memref<98xf32, #tpu.memory_space<smem>>
    %c83 = arith.constant 83 : index
    %87 = memref.load %arg2[%c83] : memref<98xf32, #tpu.memory_space<smem>>
    %c84 = arith.constant 84 : index
    %88 = memref.load %arg2[%c84] : memref<98xf32, #tpu.memory_space<smem>>
    %c85 = arith.constant 85 : index
    %89 = memref.load %arg2[%c85] : memref<98xf32, #tpu.memory_space<smem>>
    %c86 = arith.constant 86 : index
    %90 = memref.load %arg2[%c86] : memref<98xf32, #tpu.memory_space<smem>>
    %c87 = arith.constant 87 : index
    %91 = memref.load %arg2[%c87] : memref<98xf32, #tpu.memory_space<smem>>
    %c88 = arith.constant 88 : index
    %92 = memref.load %arg2[%c88] : memref<98xf32, #tpu.memory_space<smem>>
    %c89 = arith.constant 89 : index
    %93 = memref.load %arg2[%c89] : memref<98xf32, #tpu.memory_space<smem>>
    %c90 = arith.constant 90 : index
    %94 = memref.load %arg2[%c90] : memref<98xf32, #tpu.memory_space<smem>>
    %c91 = arith.constant 91 : index
    %95 = memref.load %arg2[%c91] : memref<98xf32, #tpu.memory_space<smem>>
    %c92 = arith.constant 92 : index
    %96 = memref.load %arg2[%c92] : memref<98xf32, #tpu.memory_space<smem>>
    %c93 = arith.constant 93 : index
    %97 = memref.load %arg2[%c93] : memref<98xf32, #tpu.memory_space<smem>>
    %c94 = arith.constant 94 : index
    %98 = memref.load %arg2[%c94] : memref<98xf32, #tpu.memory_space<smem>>
    %c95 = arith.constant 95 : index
    %99 = memref.load %arg2[%c95] : memref<98xf32, #tpu.memory_space<smem>>
    %c96 = arith.constant 96 : index
    %100 = memref.load %arg2[%c96] : memref<98xf32, #tpu.memory_space<smem>>
    %c97 = arith.constant 97 : index
    %101 = memref.load %arg2[%c97] : memref<98xf32, #tpu.memory_space<smem>>
    %102 = tpu.iota {dimensions = array<i32: 1>} : vector<1x384xi32>
    %c16_i32 = arith.constant 16 : i32
    %c0_i32 = arith.constant 0 : i32
    %103 = arith.cmpi eq, %c16_i32, %c0_i32 : i32
    %c1_i32 = arith.constant 1 : i32
    %104 = arith.select %103, %c1_i32, %c16_i32 : i32
    %105 = vector.broadcast %104 : i32 to vector<1x384xi32>
    %106 = arith.remsi %102, %105 : vector<1x384xi32>
    %c0_i32_5 = arith.constant 0 : i32
    %107 = vector.broadcast %c0_i32_5 : i32 to vector<1x384xi32>
    %108 = arith.cmpi ne, %106, %107 : vector<1x384xi32>
    %c0_i32_6 = arith.constant 0 : i32
    %109 = vector.broadcast %c0_i32_6 : i32 to vector<1x384xi32>
    %110 = arith.cmpi slt, %106, %109 : vector<1x384xi32>
    %c0_i32_7 = arith.constant 0 : i32
    %111 = arith.cmpi slt, %104, %c0_i32_7 : i32
    %112 = vector.broadcast %111 : i1 to vector<1x384xi1>
    %113 = vector.broadcast %112 : vector<1x384xi1> to vector<1x384xi1>
    %114 = arith.xori %110, %113 : vector<1x384xi1>
    %115 = arith.andi %114, %108 : vector<1x384xi1>
    %116 = vector.broadcast %104 : i32 to vector<1x384xi32>
    %117 = arith.addi %106, %116 : vector<1x384xi32>
    %118 = arith.select %115, %117, %106 : vector<1x384xi1>, vector<1x384xi32>
    %cst_8 = arith.constant 2.500000e-01 : f32
    %c0_i32_9 = arith.constant 0 : i32
    %cst_10 = arith.constant 0xFF800000 : f32
    %119 = vector.broadcast %cst_10 : f32 to vector<1x256xf32>
    %cst_11 = arith.constant 0.000000e+00 : f32
    %120 = vector.broadcast %cst_11 : f32 to vector<1x256xf32>
    %c0_i32_12 = arith.constant 0 : i32
    %c4_i32 = arith.constant 4 : i32
    %121 = arith.muli %c0_i32_12, %c4_i32 : i32
    %122 = tpu.assume_multiple %121, 4 : i32
    %123 = arith.index_cast %c0_i32_9 : i32 to index
    %124 = arith.index_cast %122 : i32 to index
    %c0_13 = arith.constant 0 : index
    %125 = vector.load %arg1[%123, %124, %c0_13] : memref<1x4x256xf32, #tpu.memory_space<vmem>>, vector<1x4x256xf32>
    %126 = vector.shape_cast %125 : vector<1x4x256xf32> to vector<4x256xf32>
    %cst_14 = arith.constant dense<0xFF800000> : vector<256xf32>
    %127 = vector.multi_reduction <maximumf>, %126, %cst_14 [0] : vector<4x256xf32> to vector<256xf32>
    %128 = vector.shape_cast %127 : vector<256xf32> to vector<1x256xf32>
    %129 = arith.maximumf %119, %128 : vector<1x256xf32>
    %cst_15 = arith.constant dense<0.000000e+00> : vector<256xf32>
    %130 = vector.multi_reduction <add>, %126, %cst_15 [0] : vector<4x256xf32> to vector<256xf32>
    %131 = vector.shape_cast %130 : vector<256xf32> to vector<1x256xf32>
    %132 = arith.addf %120, %131 : vector<1x256xf32>
    %c1_i32_16 = arith.constant 1 : i32
    %133 = vector.broadcast %cst_8 : f32 to vector<1x256xf32>
    %134 = arith.mulf %132, %133 : vector<1x256xf32>
    %c0_17 = arith.constant 0 : index
    %c0_18 = arith.constant 0 : index
    %c0_19 = arith.constant 0 : index
    %135 = vector.load %arg5[%c0_17, %c0_18, %c0_19] : memref<2x1x384xf32, #tpu.memory_space<vmem>>, vector<1x1x256xf32>
    %136 = vector.shape_cast %135 : vector<1x1x256xf32> to vector<1x256xf32>
    %137 = vector.shape_cast %129 : vector<1x256xf32> to vector<1x1x256xf32>
    tpu.vector_store %arg5[%c0_17, %c0_18, %c0_19], %137 {strides = array<i32>} : memref<2x1x384xf32, #tpu.memory_space<vmem>>, vector<1x1x256xf32>,
    %c1_20 = arith.constant 1 : index
    %c0_21 = arith.constant 0 : index
    %c0_22 = arith.constant 0 : index
    %138 = vector.load %arg5[%c1_20, %c0_21, %c0_22] : memref<2x1x384xf32, #tpu.memory_space<vmem>>, vector<1x1x256xf32>
    %139 = vector.shape_cast %138 : vector<1x1x256xf32> to vector<1x256xf32>
    %140 = vector.shape_cast %134 : vector<1x256xf32> to vector<1x1x256xf32>
    tpu.vector_store %arg5[%c1_20, %c0_21, %c0_22], %140 {strides = array<i32>} : memref<2x1x384xf32, #tpu.memory_space<vmem>>, vector<1x1x256xf32>,
    %c0_23 = arith.constant 0 : index
    %c0_24 = arith.constant 0 : index
    %c0_25 = arith.constant 0 : index
    %141 = vector.load %arg5[%c0_23, %c0_24, %c0_25] : memref<2x1x384xf32, #tpu.memory_space<vmem>>, vector<1x1x384xf32>
    %142 = vector.shape_cast %141 : vector<1x1x384xf32> to vector<1x384xf32>
    %c1_26 = arith.constant 1 : index
    %c0_27 = arith.constant 0 : index
    %c0_28 = arith.constant 0 : index
    %143 = vector.load %arg5[%c1_26, %c0_27, %c0_28] : memref<2x1x384xf32, #tpu.memory_space<vmem>>, vector<1x1x384xf32>
    %144 = vector.shape_cast %143 : vector<1x1x384xf32> to vector<1x384xf32>
    %cst_29 = arith.constant 0.000000e+00 : f32
    %145 = vector.broadcast %cst_29 : f32 to vector<1x384xf32>
    %c-3_i32 = arith.constant -3 : i32
    %146 = vector.broadcast %c-3_i32 : i32 to vector<1x384xi32>
    %147 = arith.addi %118, %146 : vector<1x384xi32>
    %c0_i32_30 = arith.constant 0 : i32
    %148 = vector.broadcast %c0_i32_30 : i32 to vector<1x384xi32>
    %149 = arith.cmpi sge, %147, %148 : vector<1x384xi32>
    %c-3_i32_31 = arith.constant -3 : i32
    %150 = vector.broadcast %c-3_i32_31 : i32 to vector<1x384xi32>
    %151 = arith.addi %118, %150 : vector<1x384xi32>
    %c16_i32_32 = arith.constant 16 : i32
    %152 = vector.broadcast %c16_i32_32 : i32 to vector<1x384xi32>
    %153 = arith.cmpi slt, %151, %152 : vector<1x384xi32>
    %154 = arith.andi %149, %153 : vector<1x384xi1>
    %cst_33 = arith.constant 0.000000e+00 : f32
    %155 = vector.broadcast %cst_33 : f32 to vector<1x384xf32>
    %c51_i32 = arith.constant 51 : i32
    %156 = tpu.dynamic_rotate %142 by %c51_i32 dim 1 : vector<1x384xf32>, i32 -> vector<1x384xf32>
    %157 = vector.broadcast %4 : f32 to vector<1x384xf32>
    %158 = arith.mulf %157, %156 : vector<1x384xf32>
    %159 = arith.addf %155, %158 : vector<1x384xf32>
    %c35_i32 = arith.constant 35 : i32
    %160 = tpu.dynamic_rotate %142 by %c35_i32 dim 1 : vector<1x384xf32>, i32 -> vector<1x384xf32>
    %161 = vector.broadcast %11 : f32 to vector<1x384xf32>
    %162 = arith.mulf %161, %160 : vector<1x384xf32>
    %163 = arith.addf %159, %162 : vector<1x384xf32>
    %c19_i32 = arith.constant 19 : i32
    %164 = tpu.dynamic_rotate %142 by %c19_i32 dim 1 : vector<1x384xf32>, i32 -> vector<1x384xf32>
    %165 = vector.broadcast %18 : f32 to vector<1x384xf32>
    %166 = arith.mulf %165, %164 : vector<1x384xf32>
    %167 = arith.addf %163, %166 : vector<1x384xf32>
    %c3_i32 = arith.constant 3 : i32
    %168 = tpu.dynamic_rotate %142 by %c3_i32 dim 1 : vector<1x384xf32>, i32 -> vector<1x384xf32>
    %169 = vector.broadcast %25 : f32 to vector<1x384xf32>
    %170 = arith.mulf %169, %168 : vector<1x384xf32>
    %171 = arith.addf %167, %170 : vector<1x384xf32>
    %c371_i32 = arith.constant 371 : i32
    %172 = tpu.dynamic_rotate %142 by %c371_i32 dim 1 : vector<1x384xf32>, i32 -> vector<1x384xf32>
    %173 = vector.broadcast %32 : f32 to vector<1x384xf32>
    %174 = arith.mulf %173, %172 : vector<1x384xf32>
    %175 = arith.addf %171, %174 : vector<1x384xf32>
    %c355_i32 = arith.constant 355 : i32
    %176 = tpu.dynamic_rotate %142 by %c355_i32 dim 1 : vector<1x384xf32>, i32 -> vector<1x384xf32>
    %177 = vector.broadcast %39 : f32 to vector<1x384xf32>
    %178 = arith.mulf %177, %176 : vector<1x384xf32>
    %179 = arith.addf %175, %178 : vector<1x384xf32>
    %c339_i32 = arith.constant 339 : i32
    %180 = tpu.dynamic_rotate %142 by %c339_i32 dim 1 : vector<1x384xf32>, i32 -> vector<1x384xf32>
    %181 = vector.broadcast %46 : f32 to vector<1x384xf32>
    %182 = arith.mulf %181, %180 : vector<1x384xf32>
    %183 = arith.addf %179, %182 : vector<1x384xf32>
    %c51_i32_34 = arith.constant 51 : i32
    %184 = tpu.dynamic_rotate %144 by %c51_i32_34 dim 1 : vector<1x384xf32>, i32 -> vector<1x384xf32>
    %185 = vector.broadcast %53 : f32 to vector<1x384xf32>
    %186 = arith.mulf %185, %184 : vector<1x384xf32>
    %187 = arith.addf %183, %186 : vector<1x384xf32>
    %c35_i32_35 = arith.constant 35 : i32
    %188 = tpu.dynamic_rotate %144 by %c35_i32_35 dim 1 : vector<1x384xf32>, i32 -> vector<1x384xf32>
    %189 = vector.broadcast %60 : f32 to vector<1x384xf32>
    %190 = arith.mulf %189, %188 : vector<1x384xf32>
    %191 = arith.addf %187, %190 : vector<1x384xf32>
    %c19_i32_36 = arith.constant 19 : i32
    %192 = tpu.dynamic_rotate %144 by %c19_i32_36 dim 1 : vector<1x384xf32>, i32 -> vector<1x384xf32>
    %193 = vector.broadcast %67 : f32 to vector<1x384xf32>
    %194 = arith.mulf %193, %192 : vector<1x384xf32>
    %195 = arith.addf %191, %194 : vector<1x384xf32>
    %c3_i32_37 = arith.constant 3 : i32
    %196 = tpu.dynamic_rotate %144 by %c3_i32_37 dim 1 : vector<1x384xf32>, i32 -> vector<1x384xf32>
    %197 = vector.broadcast %74 : f32 to vector<1x384xf32>
    %198 = arith.mulf %197, %196 : vector<1x384xf32>
    %199 = arith.addf %195, %198 : vector<1x384xf32>
    %c371_i32_38 = arith.constant 371 : i32
    %200 = tpu.dynamic_rotate %144 by %c371_i32_38 dim 1 : vector<1x384xf32>, i32 -> vector<1x384xf32>
    %201 = vector.broadcast %81 : f32 to vector<1x384xf32>
    %202 = arith.mulf %201, %200 : vector<1x384xf32>
    %203 = arith.addf %199, %202 : vector<1x384xf32>
    %c355_i32_39 = arith.constant 355 : i32
    %204 = tpu.dynamic_rotate %144 by %c355_i32_39 dim 1 : vector<1x384xf32>, i32 -> vector<1x384xf32>
    %205 = vector.broadcast %88 : f32 to vector<1x384xf32>
    %206 = arith.mulf %205, %204 : vector<1x384xf32>
    %207 = arith.addf %203, %206 : vector<1x384xf32>
    %c339_i32_40 = arith.constant 339 : i32
    %208 = tpu.dynamic_rotate %144 by %c339_i32_40 dim 1 : vector<1x384xf32>, i32 -> vector<1x384xf32>
    %209 = vector.broadcast %95 : f32 to vector<1x384xf32>
    %210 = arith.mulf %209, %208 : vector<1x384xf32>
    %211 = arith.addf %207, %210 : vector<1x384xf32>
    %cst_41 = arith.constant 0.000000e+00 : f32
    %212 = vector.broadcast %cst_41 : f32 to vector<1x384xf32>
    %213 = arith.select %154, %211, %212 : vector<1x384xi1>, vector<1x384xf32>
    %214 = arith.addf %145, %213 : vector<1x384xf32>
    %c-2_i32 = arith.constant -2 : i32
    %215 = vector.broadcast %c-2_i32 : i32 to vector<1x384xi32>
    %216 = arith.addi %118, %215 : vector<1x384xi32>
    %c0_i32_42 = arith.constant 0 : i32
    %217 = vector.broadcast %c0_i32_42 : i32 to vector<1x384xi32>
    %218 = arith.cmpi sge, %216, %217 : vector<1x384xi32>
    %c-2_i32_43 = arith.constant -2 : i32
    %219 = vector.broadcast %c-2_i32_43 : i32 to vector<1x384xi32>
    %220 = arith.addi %118, %219 : vector<1x384xi32>
    %c16_i32_44 = arith.constant 16 : i32
    %221 = vector.broadcast %c16_i32_44 : i32 to vector<1x384xi32>
    %222 = arith.cmpi slt, %220, %221 : vector<1x384xi32>
    %223 = arith.andi %218, %222 : vector<1x384xi1>
    %cst_45 = arith.constant 0.000000e+00 : f32
    %224 = vector.broadcast %cst_45 : f32 to vector<1x384xf32>
    %c50_i32 = arith.constant 50 : i32
    %225 = tpu.dynamic_rotate %142 by %c50_i32 dim 1 : vector<1x384xf32>, i32 -> vector<1x384xf32>
    %226 = vector.broadcast %5 : f32 to vector<1x384xf32>
    %227 = arith.mulf %226, %225 : vector<1x384xf32>
    %228 = arith.addf %224, %227 : vector<1x384xf32>
    %c34_i32 = arith.constant 34 : i32
    %229 = tpu.dynamic_rotate %142 by %c34_i32 dim 1 : vector<1x384xf32>, i32 -> vector<1x384xf32>
    %230 = vector.broadcast %12 : f32 to vector<1x384xf32>
    %231 = arith.mulf %230, %229 : vector<1x384xf32>
    %232 = arith.addf %228, %231 : vector<1x384xf32>
    %c18_i32 = arith.constant 18 : i32
    %233 = tpu.dynamic_rotate %142 by %c18_i32 dim 1 : vector<1x384xf32>, i32 -> vector<1x384xf32>
    %234 = vector.broadcast %19 : f32 to vector<1x384xf32>
    %235 = arith.mulf %234, %233 : vector<1x384xf32>
    %236 = arith.addf %232, %235 : vector<1x384xf32>
    %c2_i32 = arith.constant 2 : i32
    %237 = tpu.dynamic_rotate %142 by %c2_i32 dim 1 : vector<1x384xf32>, i32 -> vector<1x384xf32>
    %238 = vector.broadcast %26 : f32 to vector<1x384xf32>
    %239 = arith.mulf %238, %237 : vector<1x384xf32>
    %240 = arith.addf %236, %239 : vector<1x384xf32>
    %c370_i32 = arith.constant 370 : i32
    %241 = tpu.dynamic_rotate %142 by %c370_i32 dim 1 : vector<1x384xf32>, i32 -> vector<1x384xf32>
    %242 = vector.broadcast %33 : f32 to vector<1x384xf32>
    %243 = arith.mulf %242, %241 : vector<1x384xf32>
    %244 = arith.addf %240, %243 : vector<1x384xf32>
    %c354_i32 = arith.constant 354 : i32
    %245 = tpu.dynamic_rotate %142 by %c354_i32 dim 1 : vector<1x384xf32>, i32 -> vector<1x384xf32>
    %246 = vector.broadcast %40 : f32 to vector<1x384xf32>
    %247 = arith.mulf %246, %245 : vector<1x384xf32>
    %248 = arith.addf %244, %247 : vector<1x384xf32>
    %c338_i32 = arith.constant 338 : i32
    %249 = tpu.dynamic_rotate %142 by %c338_i32 dim 1 : vector<1x384xf32>, i32 -> vector<1x384xf32>
    %250 = vector.broadcast %47 : f32 to vector<1x384xf32>
    %251 = arith.mulf %250, %249 : vector<1x384xf32>
    %252 = arith.addf %248, %251 : vector<1x384xf32>
    %c50_i32_46 = arith.constant 50 : i32
    %253 = tpu.dynamic_rotate %144 by %c50_i32_46 dim 1 : vector<1x384xf32>, i32 -> vector<1x384xf32>
    %254 = vector.broadcast %54 : f32 to vector<1x384xf32>
    %255 = arith.mulf %254, %253 : vector<1x384xf32>
    %256 = arith.addf %252, %255 : vector<1x384xf32>
    %c34_i32_47 = arith.constant 34 : i32
    %257 = tpu.dynamic_rotate %144 by %c34_i32_47 dim 1 : vector<1x384xf32>, i32 -> vector<1x384xf32>
    %258 = vector.broadcast %61 : f32 to vector<1x384xf32>
    %259 = arith.mulf %258, %257 : vector<1x384xf32>
    %260 = arith.addf %256, %259 : vector<1x384xf32>
    %c18_i32_48 = arith.constant 18 : i32
    %261 = tpu.dynamic_rotate %144 by %c18_i32_48 dim 1 : vector<1x384xf32>, i32 -> vector<1x384xf32>
    %262 = vector.broadcast %68 : f32 to vector<1x384xf32>
    %263 = arith.mulf %262, %261 : vector<1x384xf32>
    %264 = arith.addf %260, %263 : vector<1x384xf32>
    %c2_i32_49 = arith.constant 2 : i32
    %265 = tpu.dynamic_rotate %144 by %c2_i32_49 dim 1 : vector<1x384xf32>, i32 -> vector<1x384xf32>
    %266 = vector.broadcast %75 : f32 to vector<1x384xf32>
    %267 = arith.mulf %266, %265 : vector<1x384xf32>
    %268 = arith.addf %264, %267 : vector<1x384xf32>
    %c370_i32_50 = arith.constant 370 : i32
    %269 = tpu.dynamic_rotate %144 by %c370_i32_50 dim 1 : vector<1x384xf32>, i32 -> vector<1x384xf32>
    %270 = vector.broadcast %82 : f32 to vector<1x384xf32>
    %271 = arith.mulf %270, %269 : vector<1x384xf32>
    %272 = arith.addf %268, %271 : vector<1x384xf32>
    %c354_i32_51 = arith.constant 354 : i32
    %273 = tpu.dynamic_rotate %144 by %c354_i32_51 dim 1 : vector<1x384xf32>, i32 -> vector<1x384xf32>
    %274 = vector.broadcast %89 : f32 to vector<1x384xf32>
    %275 = arith.mulf %274, %273 : vector<1x384xf32>
    %276 = arith.addf %272, %275 : vector<1x384xf32>
    %c338_i32_52 = arith.constant 338 : i32
    %277 = tpu.dynamic_rotate %144 by %c338_i32_52 dim 1 : vector<1x384xf32>, i32 -> vector<1x384xf32>
    %278 = vector.broadcast %96 : f32 to vector<1x384xf32>
    %279 = arith.mulf %278, %277 : vector<1x384xf32>
    %280 = arith.addf %276, %279 : vector<1x384xf32>
    %cst_53 = arith.constant 0.000000e+00 : f32
    %281 = vector.broadcast %cst_53 : f32 to vector<1x384xf32>
    %282 = arith.select %223, %280, %281 : vector<1x384xi1>, vector<1x384xf32>
    %283 = arith.addf %214, %282 : vector<1x384xf32>
    %c-1_i32 = arith.constant -1 : i32
    %284 = vector.broadcast %c-1_i32 : i32 to vector<1x384xi32>
    %285 = arith.addi %118, %284 : vector<1x384xi32>
    %c0_i32_54 = arith.constant 0 : i32
    %286 = vector.broadcast %c0_i32_54 : i32 to vector<1x384xi32>
    %287 = arith.cmpi sge, %285, %286 : vector<1x384xi32>
    %c-1_i32_55 = arith.constant -1 : i32
    %288 = vector.broadcast %c-1_i32_55 : i32 to vector<1x384xi32>
    %289 = arith.addi %118, %288 : vector<1x384xi32>
    %c16_i32_56 = arith.constant 16 : i32
    %290 = vector.broadcast %c16_i32_56 : i32 to vector<1x384xi32>
    %291 = arith.cmpi slt, %289, %290 : vector<1x384xi32>
    %292 = arith.andi %287, %291 : vector<1x384xi1>
    %cst_57 = arith.constant 0.000000e+00 : f32
    %293 = vector.broadcast %cst_57 : f32 to vector<1x384xf32>
    %c49_i32 = arith.constant 49 : i32
    %294 = tpu.dynamic_rotate %142 by %c49_i32 dim 1 : vector<1x384xf32>, i32 -> vector<1x384xf32>
    %295 = vector.broadcast %6 : f32 to vector<1x384xf32>
    %296 = arith.mulf %295, %294 : vector<1x384xf32>
    %297 = arith.addf %293, %296 : vector<1x384xf32>
    %c33_i32 = arith.constant 33 : i32
    %298 = tpu.dynamic_rotate %142 by %c33_i32 dim 1 : vector<1x384xf32>, i32 -> vector<1x384xf32>
    %299 = vector.broadcast %13 : f32 to vector<1x384xf32>
    %300 = arith.mulf %299, %298 : vector<1x384xf32>
    %301 = arith.addf %297, %300 : vector<1x384xf32>
    %c17_i32 = arith.constant 17 : i32
    %302 = tpu.dynamic_rotate %142 by %c17_i32 dim 1 : vector<1x384xf32>, i32 -> vector<1x384xf32>
    %303 = vector.broadcast %20 : f32 to vector<1x384xf32>
    %304 = arith.mulf %303, %302 : vector<1x384xf32>
    %305 = arith.addf %301, %304 : vector<1x384xf32>
    %c1_i32_58 = arith.constant 1 : i32
    %306 = tpu.dynamic_rotate %142 by %c1_i32_58 dim 1 : vector<1x384xf32>, i32 -> vector<1x384xf32>
    %307 = vector.broadcast %27 : f32 to vector<1x384xf32>
    %308 = arith.mulf %307, %306 : vector<1x384xf32>
    %309 = arith.addf %305, %308 : vector<1x384xf32>
    %c369_i32 = arith.constant 369 : i32
    %310 = tpu.dynamic_rotate %142 by %c369_i32 dim 1 : vector<1x384xf32>, i32 -> vector<1x384xf32>
    %311 = vector.broadcast %34 : f32 to vector<1x384xf32>
    %312 = arith.mulf %311, %310 : vector<1x384xf32>
    %313 = arith.addf %309, %312 : vector<1x384xf32>
    %c353_i32 = arith.constant 353 : i32
    %314 = tpu.dynamic_rotate %142 by %c353_i32 dim 1 : vector<1x384xf32>, i32 -> vector<1x384xf32>
    %315 = vector.broadcast %41 : f32 to vector<1x384xf32>
    %316 = arith.mulf %315, %314 : vector<1x384xf32>
    %317 = arith.addf %313, %316 : vector<1x384xf32>
    %c337_i32 = arith.constant 337 : i32
    %318 = tpu.dynamic_rotate %142 by %c337_i32 dim 1 : vector<1x384xf32>, i32 -> vector<1x384xf32>
    %319 = vector.broadcast %48 : f32 to vector<1x384xf32>
    %320 = arith.mulf %319, %318 : vector<1x384xf32>
    %321 = arith.addf %317, %320 : vector<1x384xf32>
    %c49_i32_59 = arith.constant 49 : i32
    %322 = tpu.dynamic_rotate %144 by %c49_i32_59 dim 1 : vector<1x384xf32>, i32 -> vector<1x384xf32>
    %323 = vector.broadcast %55 : f32 to vector<1x384xf32>
    %324 = arith.mulf %323, %322 : vector<1x384xf32>
    %325 = arith.addf %321, %324 : vector<1x384xf32>
    %c33_i32_60 = arith.constant 33 : i32
    %326 = tpu.dynamic_rotate %144 by %c33_i32_60 dim 1 : vector<1x384xf32>, i32 -> vector<1x384xf32>
    %327 = vector.broadcast %62 : f32 to vector<1x384xf32>
    %328 = arith.mulf %327, %326 : vector<1x384xf32>
    %329 = arith.addf %325, %328 : vector<1x384xf32>
    %c17_i32_61 = arith.constant 17 : i32
    %330 = tpu.dynamic_rotate %144 by %c17_i32_61 dim 1 : vector<1x384xf32>, i32 -> vector<1x384xf32>
    %331 = vector.broadcast %69 : f32 to vector<1x384xf32>
    %332 = arith.mulf %331, %330 : vector<1x384xf32>
    %333 = arith.addf %329, %332 : vector<1x384xf32>
    %c1_i32_62 = arith.constant 1 : i32
    %334 = tpu.dynamic_rotate %144 by %c1_i32_62 dim 1 : vector<1x384xf32>, i32 -> vector<1x384xf32>
    %335 = vector.broadcast %76 : f32 to vector<1x384xf32>
    %336 = arith.mulf %335, %334 : vector<1x384xf32>
    %337 = arith.addf %333, %336 : vector<1x384xf32>
    %c369_i32_63 = arith.constant 369 : i32
    %338 = tpu.dynamic_rotate %144 by %c369_i32_63 dim 1 : vector<1x384xf32>, i32 -> vector<1x384xf32>
    %339 = vector.broadcast %83 : f32 to vector<1x384xf32>
    %340 = arith.mulf %339, %338 : vector<1x384xf32>
    %341 = arith.addf %337, %340 : vector<1x384xf32>
    %c353_i32_64 = arith.constant 353 : i32
    %342 = tpu.dynamic_rotate %144 by %c353_i32_64 dim 1 : vector<1x384xf32>, i32 -> vector<1x384xf32>
    %343 = vector.broadcast %90 : f32 to vector<1x384xf32>
    %344 = arith.mulf %343, %342 : vector<1x384xf32>
    %345 = arith.addf %341, %344 : vector<1x384xf32>
    %c337_i32_65 = arith.constant 337 : i32
    %346 = tpu.dynamic_rotate %144 by %c337_i32_65 dim 1 : vector<1x384xf32>, i32 -> vector<1x384xf32>
    %347 = vector.broadcast %97 : f32 to vector<1x384xf32>
    %348 = arith.mulf %347, %346 : vector<1x384xf32>
    %349 = arith.addf %345, %348 : vector<1x384xf32>
    %cst_66 = arith.constant 0.000000e+00 : f32
    %350 = vector.broadcast %cst_66 : f32 to vector<1x384xf32>
    %351 = arith.select %292, %349, %350 : vector<1x384xi1>, vector<1x384xf32>
    %352 = arith.addf %283, %351 : vector<1x384xf32>
    %c0_i32_67 = arith.constant 0 : i32
    %353 = vector.broadcast %c0_i32_67 : i32 to vector<1x384xi32>
    %354 = arith.addi %118, %353 : vector<1x384xi32>
    %c0_i32_68 = arith.constant 0 : i32
    %355 = vector.broadcast %c0_i32_68 : i32 to vector<1x384xi32>
    %356 = arith.cmpi sge, %354, %355 : vector<1x384xi32>
    %c0_i32_69 = arith.constant 0 : i32
    %357 = vector.broadcast %c0_i32_69 : i32 to vector<1x384xi32>
    %358 = arith.addi %118, %357 : vector<1x384xi32>
    %c16_i32_70 = arith.constant 16 : i32
    %359 = vector.broadcast %c16_i32_70 : i32 to vector<1x384xi32>
    %360 = arith.cmpi slt, %358, %359 : vector<1x384xi32>
    %361 = arith.andi %356, %360 : vector<1x384xi1>
    %cst_71 = arith.constant 0.000000e+00 : f32
    %362 = vector.broadcast %cst_71 : f32 to vector<1x384xf32>
    %c48_i32 = arith.constant 48 : i32
    %363 = tpu.dynamic_rotate %142 by %c48_i32 dim 1 : vector<1x384xf32>, i32 -> vector<1x384xf32>
    %364 = vector.broadcast %7 : f32 to vector<1x384xf32>
    %365 = arith.mulf %364, %363 : vector<1x384xf32>
    %366 = arith.addf %362, %365 : vector<1x384xf32>
    %c32_i32 = arith.constant 32 : i32
    %367 = tpu.dynamic_rotate %142 by %c32_i32 dim 1 : vector<1x384xf32>, i32 -> vector<1x384xf32>
    %368 = vector.broadcast %14 : f32 to vector<1x384xf32>
    %369 = arith.mulf %368, %367 : vector<1x384xf32>
    %370 = arith.addf %366, %369 : vector<1x384xf32>
    %c16_i32_72 = arith.constant 16 : i32
    %371 = tpu.dynamic_rotate %142 by %c16_i32_72 dim 1 : vector<1x384xf32>, i32 -> vector<1x384xf32>
    %372 = vector.broadcast %21 : f32 to vector<1x384xf32>
    %373 = arith.mulf %372, %371 : vector<1x384xf32>
    %374 = arith.addf %370, %373 : vector<1x384xf32>
    %375 = vector.broadcast %28 : f32 to vector<1x384xf32>
    %376 = arith.mulf %375, %142 : vector<1x384xf32>
    %377 = arith.addf %374, %376 : vector<1x384xf32>
    %c368_i32 = arith.constant 368 : i32
    %378 = tpu.dynamic_rotate %142 by %c368_i32 dim 1 : vector<1x384xf32>, i32 -> vector<1x384xf32>
    %379 = vector.broadcast %35 : f32 to vector<1x384xf32>
    %380 = arith.mulf %379, %378 : vector<1x384xf32>
    %381 = arith.addf %377, %380 : vector<1x384xf32>
    %c352_i32 = arith.constant 352 : i32
    %382 = tpu.dynamic_rotate %142 by %c352_i32 dim 1 : vector<1x384xf32>, i32 -> vector<1x384xf32>
    %383 = vector.broadcast %42 : f32 to vector<1x384xf32>
    %384 = arith.mulf %383, %382 : vector<1x384xf32>
    %385 = arith.addf %381, %384 : vector<1x384xf32>
    %c336_i32 = arith.constant 336 : i32
    %386 = tpu.dynamic_rotate %142 by %c336_i32 dim 1 : vector<1x384xf32>, i32 -> vector<1x384xf32>
    %387 = vector.broadcast %49 : f32 to vector<1x384xf32>
    %388 = arith.mulf %387, %386 : vector<1x384xf32>
    %389 = arith.addf %385, %388 : vector<1x384xf32>
    %c48_i32_73 = arith.constant 48 : i32
    %390 = tpu.dynamic_rotate %144 by %c48_i32_73 dim 1 : vector<1x384xf32>, i32 -> vector<1x384xf32>
    %391 = vector.broadcast %56 : f32 to vector<1x384xf32>
    %392 = arith.mulf %391, %390 : vector<1x384xf32>
    %393 = arith.addf %389, %392 : vector<1x384xf32>
    %c32_i32_74 = arith.constant 32 : i32
    %394 = tpu.dynamic_rotate %144 by %c32_i32_74 dim 1 : vector<1x384xf32>, i32 -> vector<1x384xf32>
    %395 = vector.broadcast %63 : f32 to vector<1x384xf32>
    %396 = arith.mulf %395, %394 : vector<1x384xf32>
    %397 = arith.addf %393, %396 : vector<1x384xf32>
    %c16_i32_75 = arith.constant 16 : i32
    %398 = tpu.dynamic_rotate %144 by %c16_i32_75 dim 1 : vector<1x384xf32>, i32 -> vector<1x384xf32>
    %399 = vector.broadcast %70 : f32 to vector<1x384xf32>
    %400 = arith.mulf %399, %398 : vector<1x384xf32>
    %401 = arith.addf %397, %400 : vector<1x384xf32>
    %402 = vector.broadcast %77 : f32 to vector<1x384xf32>
    %403 = arith.mulf %402, %144 : vector<1x384xf32>
    %404 = arith.addf %401, %403 : vector<1x384xf32>
    %c368_i32_76 = arith.constant 368 : i32
    %405 = tpu.dynamic_rotate %144 by %c368_i32_76 dim 1 : vector<1x384xf32>, i32 -> vector<1x384xf32>
    %406 = vector.broadcast %84 : f32 to vector<1x384xf32>
    %407 = arith.mulf %406, %405 : vector<1x384xf32>
    %408 = arith.addf %404, %407 : vector<1x384xf32>
    %c352_i32_77 = arith.constant 352 : i32
    %409 = tpu.dynamic_rotate %144 by %c352_i32_77 dim 1 : vector<1x384xf32>, i32 -> vector<1x384xf32>
    %410 = vector.broadcast %91 : f32 to vector<1x384xf32>
    %411 = arith.mulf %410, %409 : vector<1x384xf32>
    %412 = arith.addf %408, %411 : vector<1x384xf32>
    %c336_i32_78 = arith.constant 336 : i32
    %413 = tpu.dynamic_rotate %144 by %c336_i32_78 dim 1 : vector<1x384xf32>, i32 -> vector<1x384xf32>
    %414 = vector.broadcast %98 : f32 to vector<1x384xf32>
    %415 = arith.mulf %414, %413 : vector<1x384xf32>
    %416 = arith.addf %412, %415 : vector<1x384xf32>
    %cst_79 = arith.constant 0.000000e+00 : f32
    %417 = vector.broadcast %cst_79 : f32 to vector<1x384xf32>
    %418 = arith.select %361, %416, %417 : vector<1x384xi1>, vector<1x384xf32>
    %419 = arith.addf %352, %418 : vector<1x384xf32>
    %c1_i32_80 = arith.constant 1 : i32
    %420 = vector.broadcast %c1_i32_80 : i32 to vector<1x384xi32>
    %421 = arith.addi %118, %420 : vector<1x384xi32>
    %c0_i32_81 = arith.constant 0 : i32
    %422 = vector.broadcast %c0_i32_81 : i32 to vector<1x384xi32>
    %423 = arith.cmpi sge, %421, %422 : vector<1x384xi32>
    %c1_i32_82 = arith.constant 1 : i32
    %424 = vector.broadcast %c1_i32_82 : i32 to vector<1x384xi32>
    %425 = arith.addi %118, %424 : vector<1x384xi32>
    %c16_i32_83 = arith.constant 16 : i32
    %426 = vector.broadcast %c16_i32_83 : i32 to vector<1x384xi32>
    %427 = arith.cmpi slt, %425, %426 : vector<1x384xi32>
    %428 = arith.andi %423, %427 : vector<1x384xi1>
    %cst_84 = arith.constant 0.000000e+00 : f32
    %429 = vector.broadcast %cst_84 : f32 to vector<1x384xf32>
    %c47_i32 = arith.constant 47 : i32
    %430 = tpu.dynamic_rotate %142 by %c47_i32 dim 1 : vector<1x384xf32>, i32 -> vector<1x384xf32>
    %431 = vector.broadcast %8 : f32 to vector<1x384xf32>
    %432 = arith.mulf %431, %430 : vector<1x384xf32>
    %433 = arith.addf %429, %432 : vector<1x384xf32>
    %c31_i32 = arith.constant 31 : i32
    %434 = tpu.dynamic_rotate %142 by %c31_i32 dim 1 : vector<1x384xf32>, i32 -> vector<1x384xf32>
    %435 = vector.broadcast %15 : f32 to vector<1x384xf32>
    %436 = arith.mulf %435, %434 : vector<1x384xf32>
    %437 = arith.addf %433, %436 : vector<1x384xf32>
    %c15_i32 = arith.constant 15 : i32
    %438 = tpu.dynamic_rotate %142 by %c15_i32 dim 1 : vector<1x384xf32>, i32 -> vector<1x384xf32>
    %439 = vector.broadcast %22 : f32 to vector<1x384xf32>
    %440 = arith.mulf %439, %438 : vector<1x384xf32>
    %441 = arith.addf %437, %440 : vector<1x384xf32>
    %c383_i32 = arith.constant 383 : i32
    %442 = tpu.dynamic_rotate %142 by %c383_i32 dim 1 : vector<1x384xf32>, i32 -> vector<1x384xf32>
    %443 = vector.broadcast %29 : f32 to vector<1x384xf32>
    %444 = arith.mulf %443, %442 : vector<1x384xf32>
    %445 = arith.addf %441, %444 : vector<1x384xf32>
    %c367_i32 = arith.constant 367 : i32
    %446 = tpu.dynamic_rotate %142 by %c367_i32 dim 1 : vector<1x384xf32>, i32 -> vector<1x384xf32>
    %447 = vector.broadcast %36 : f32 to vector<1x384xf32>
    %448 = arith.mulf %447, %446 : vector<1x384xf32>
    %449 = arith.addf %445, %448 : vector<1x384xf32>
    %c351_i32 = arith.constant 351 : i32
    %450 = tpu.dynamic_rotate %142 by %c351_i32 dim 1 : vector<1x384xf32>, i32 -> vector<1x384xf32>
    %451 = vector.broadcast %43 : f32 to vector<1x384xf32>
    %452 = arith.mulf %451, %450 : vector<1x384xf32>
    %453 = arith.addf %449, %452 : vector<1x384xf32>
    %c335_i32 = arith.constant 335 : i32
    %454 = tpu.dynamic_rotate %142 by %c335_i32 dim 1 : vector<1x384xf32>, i32 -> vector<1x384xf32>
    %455 = vector.broadcast %50 : f32 to vector<1x384xf32>
    %456 = arith.mulf %455, %454 : vector<1x384xf32>
    %457 = arith.addf %453, %456 : vector<1x384xf32>
    %c47_i32_85 = arith.constant 47 : i32
    %458 = tpu.dynamic_rotate %144 by %c47_i32_85 dim 1 : vector<1x384xf32>, i32 -> vector<1x384xf32>
    %459 = vector.broadcast %57 : f32 to vector<1x384xf32>
    %460 = arith.mulf %459, %458 : vector<1x384xf32>
    %461 = arith.addf %457, %460 : vector<1x384xf32>
    %c31_i32_86 = arith.constant 31 : i32
    %462 = tpu.dynamic_rotate %144 by %c31_i32_86 dim 1 : vector<1x384xf32>, i32 -> vector<1x384xf32>
    %463 = vector.broadcast %64 : f32 to vector<1x384xf32>
    %464 = arith.mulf %463, %462 : vector<1x384xf32>
    %465 = arith.addf %461, %464 : vector<1x384xf32>
    %c15_i32_87 = arith.constant 15 : i32
    %466 = tpu.dynamic_rotate %144 by %c15_i32_87 dim 1 : vector<1x384xf32>, i32 -> vector<1x384xf32>
    %467 = vector.broadcast %71 : f32 to vector<1x384xf32>
    %468 = arith.mulf %467, %466 : vector<1x384xf32>
    %469 = arith.addf %465, %468 : vector<1x384xf32>
    %c383_i32_88 = arith.constant 383 : i32
    %470 = tpu.dynamic_rotate %144 by %c383_i32_88 dim 1 : vector<1x384xf32>, i32 -> vector<1x384xf32>
    %471 = vector.broadcast %78 : f32 to vector<1x384xf32>
    %472 = arith.mulf %471, %470 : vector<1x384xf32>
    %473 = arith.addf %469, %472 : vector<1x384xf32>
    %c367_i32_89 = arith.constant 367 : i32
    %474 = tpu.dynamic_rotate %144 by %c367_i32_89 dim 1 : vector<1x384xf32>, i32 -> vector<1x384xf32>
    %475 = vector.broadcast %85 : f32 to vector<1x384xf32>
    %476 = arith.mulf %475, %474 : vector<1x384xf32>
    %477 = arith.addf %473, %476 : vector<1x384xf32>
    %c351_i32_90 = arith.constant 351 : i32
    %478 = tpu.dynamic_rotate %144 by %c351_i32_90 dim 1 : vector<1x384xf32>, i32 -> vector<1x384xf32>
    %479 = vector.broadcast %92 : f32 to vector<1x384xf32>
    %480 = arith.mulf %479, %478 : vector<1x384xf32>
    %481 = arith.addf %477, %480 : vector<1x384xf32>
    %c335_i32_91 = arith.constant 335 : i32
    %482 = tpu.dynamic_rotate %144 by %c335_i32_91 dim 1 : vector<1x384xf32>, i32 -> vector<1x384xf32>
    %483 = vector.broadcast %99 : f32 to vector<1x384xf32>
    %484 = arith.mulf %483, %482 : vector<1x384xf32>
    %485 = arith.addf %481, %484 : vector<1x384xf32>
    %cst_92 = arith.constant 0.000000e+00 : f32
    %486 = vector.broadcast %cst_92 : f32 to vector<1x384xf32>
    %487 = arith.select %428, %485, %486 : vector<1x384xi1>, vector<1x384xf32>
    %488 = arith.addf %419, %487 : vector<1x384xf32>
    %c2_i32_93 = arith.constant 2 : i32
    %489 = vector.broadcast %c2_i32_93 : i32 to vector<1x384xi32>
    %490 = arith.addi %118, %489 : vector<1x384xi32>
    %c0_i32_94 = arith.constant 0 : i32
    %491 = vector.broadcast %c0_i32_94 : i32 to vector<1x384xi32>
    %492 = arith.cmpi sge, %490, %491 : vector<1x384xi32>
    %c2_i32_95 = arith.constant 2 : i32
    %493 = vector.broadcast %c2_i32_95 : i32 to vector<1x384xi32>
    %494 = arith.addi %118, %493 : vector<1x384xi32>
    %c16_i32_96 = arith.constant 16 : i32
    %495 = vector.broadcast %c16_i32_96 : i32 to vector<1x384xi32>
    %496 = arith.cmpi slt, %494, %495 : vector<1x384xi32>
    %497 = arith.andi %492, %496 : vector<1x384xi1>
    %cst_97 = arith.constant 0.000000e+00 : f32
    %498 = vector.broadcast %cst_97 : f32 to vector<1x384xf32>
    %c46_i32 = arith.constant 46 : i32
    %499 = tpu.dynamic_rotate %142 by %c46_i32 dim 1 : vector<1x384xf32>, i32 -> vector<1x384xf32>
    %500 = vector.broadcast %9 : f32 to vector<1x384xf32>
    %501 = arith.mulf %500, %499 : vector<1x384xf32>
    %502 = arith.addf %498, %501 : vector<1x384xf32>
    %c30_i32 = arith.constant 30 : i32
    %503 = tpu.dynamic_rotate %142 by %c30_i32 dim 1 : vector<1x384xf32>, i32 -> vector<1x384xf32>
    %504 = vector.broadcast %16 : f32 to vector<1x384xf32>
    %505 = arith.mulf %504, %503 : vector<1x384xf32>
    %506 = arith.addf %502, %505 : vector<1x384xf32>
    %c14_i32 = arith.constant 14 : i32
    %507 = tpu.dynamic_rotate %142 by %c14_i32 dim 1 : vector<1x384xf32>, i32 -> vector<1x384xf32>
    %508 = vector.broadcast %23 : f32 to vector<1x384xf32>
    %509 = arith.mulf %508, %507 : vector<1x384xf32>
    %510 = arith.addf %506, %509 : vector<1x384xf32>
    %c382_i32 = arith.constant 382 : i32
    %511 = tpu.dynamic_rotate %142 by %c382_i32 dim 1 : vector<1x384xf32>, i32 -> vector<1x384xf32>
    %512 = vector.broadcast %30 : f32 to vector<1x384xf32>
    %513 = arith.mulf %512, %511 : vector<1x384xf32>
    %514 = arith.addf %510, %513 : vector<1x384xf32>
    %c366_i32 = arith.constant 366 : i32
    %515 = tpu.dynamic_rotate %142 by %c366_i32 dim 1 : vector<1x384xf32>, i32 -> vector<1x384xf32>
    %516 = vector.broadcast %37 : f32 to vector<1x384xf32>
    %517 = arith.mulf %516, %515 : vector<1x384xf32>
    %518 = arith.addf %514, %517 : vector<1x384xf32>
    %c350_i32 = arith.constant 350 : i32
    %519 = tpu.dynamic_rotate %142 by %c350_i32 dim 1 : vector<1x384xf32>, i32 -> vector<1x384xf32>
    %520 = vector.broadcast %44 : f32 to vector<1x384xf32>
    %521 = arith.mulf %520, %519 : vector<1x384xf32>
    %522 = arith.addf %518, %521 : vector<1x384xf32>
    %c334_i32 = arith.constant 334 : i32
    %523 = tpu.dynamic_rotate %142 by %c334_i32 dim 1 : vector<1x384xf32>, i32 -> vector<1x384xf32>
    %524 = vector.broadcast %51 : f32 to vector<1x384xf32>
    %525 = arith.mulf %524, %523 : vector<1x384xf32>
    %526 = arith.addf %522, %525 : vector<1x384xf32>
    %c46_i32_98 = arith.constant 46 : i32
    %527 = tpu.dynamic_rotate %144 by %c46_i32_98 dim 1 : vector<1x384xf32>, i32 -> vector<1x384xf32>
    %528 = vector.broadcast %58 : f32 to vector<1x384xf32>
    %529 = arith.mulf %528, %527 : vector<1x384xf32>
    %530 = arith.addf %526, %529 : vector<1x384xf32>
    %c30_i32_99 = arith.constant 30 : i32
    %531 = tpu.dynamic_rotate %144 by %c30_i32_99 dim 1 : vector<1x384xf32>, i32 -> vector<1x384xf32>
    %532 = vector.broadcast %65 : f32 to vector<1x384xf32>
    %533 = arith.mulf %532, %531 : vector<1x384xf32>
    %534 = arith.addf %530, %533 : vector<1x384xf32>
    %c14_i32_100 = arith.constant 14 : i32
    %535 = tpu.dynamic_rotate %144 by %c14_i32_100 dim 1 : vector<1x384xf32>, i32 -> vector<1x384xf32>
    %536 = vector.broadcast %72 : f32 to vector<1x384xf32>
    %537 = arith.mulf %536, %535 : vector<1x384xf32>
    %538 = arith.addf %534, %537 : vector<1x384xf32>
    %c382_i32_101 = arith.constant 382 : i32
    %539 = tpu.dynamic_rotate %144 by %c382_i32_101 dim 1 : vector<1x384xf32>, i32 -> vector<1x384xf32>
    %540 = vector.broadcast %79 : f32 to vector<1x384xf32>
    %541 = arith.mulf %540, %539 : vector<1x384xf32>
    %542 = arith.addf %538, %541 : vector<1x384xf32>
    %c366_i32_102 = arith.constant 366 : i32
    %543 = tpu.dynamic_rotate %144 by %c366_i32_102 dim 1 : vector<1x384xf32>, i32 -> vector<1x384xf32>
    %544 = vector.broadcast %86 : f32 to vector<1x384xf32>
    %545 = arith.mulf %544, %543 : vector<1x384xf32>
    %546 = arith.addf %542, %545 : vector<1x384xf32>
    %c350_i32_103 = arith.constant 350 : i32
    %547 = tpu.dynamic_rotate %144 by %c350_i32_103 dim 1 : vector<1x384xf32>, i32 -> vector<1x384xf32>
    %548 = vector.broadcast %93 : f32 to vector<1x384xf32>
    %549 = arith.mulf %548, %547 : vector<1x384xf32>
    %550 = arith.addf %546, %549 : vector<1x384xf32>
    %c334_i32_104 = arith.constant 334 : i32
    %551 = tpu.dynamic_rotate %144 by %c334_i32_104 dim 1 : vector<1x384xf32>, i32 -> vector<1x384xf32>
    %552 = vector.broadcast %100 : f32 to vector<1x384xf32>
    %553 = arith.mulf %552, %551 : vector<1x384xf32>
    %554 = arith.addf %550, %553 : vector<1x384xf32>
    %cst_105 = arith.constant 0.000000e+00 : f32
    %555 = vector.broadcast %cst_105 : f32 to vector<1x384xf32>
    %556 = arith.select %497, %554, %555 : vector<1x384xi1>, vector<1x384xf32>
    %557 = arith.addf %488, %556 : vector<1x384xf32>
    %c3_i32_106 = arith.constant 3 : i32
    %558 = vector.broadcast %c3_i32_106 : i32 to vector<1x384xi32>
    %559 = arith.addi %118, %558 : vector<1x384xi32>
    %c0_i32_107 = arith.constant 0 : i32
    %560 = vector.broadcast %c0_i32_107 : i32 to vector<1x384xi32>
    %561 = arith.cmpi sge, %559, %560 : vector<1x384xi32>
    %c3_i32_108 = arith.constant 3 : i32
    %562 = vector.broadcast %c3_i32_108 : i32 to vector<1x384xi32>
    %563 = arith.addi %118, %562 : vector<1x384xi32>
    %c16_i32_109 = arith.constant 16 : i32
    %564 = vector.broadcast %c16_i32_109 : i32 to vector<1x384xi32>
    %565 = arith.cmpi slt, %563, %564 : vector<1x384xi32>
    %566 = arith.andi %561, %565 : vector<1x384xi1>
    %cst_110 = arith.constant 0.000000e+00 : f32
    %567 = vector.broadcast %cst_110 : f32 to vector<1x384xf32>
    %c45_i32 = arith.constant 45 : i32
    %568 = tpu.dynamic_rotate %142 by %c45_i32 dim 1 : vector<1x384xf32>, i32 -> vector<1x384xf32>
    %569 = vector.broadcast %10 : f32 to vector<1x384xf32>
    %570 = arith.mulf %569, %568 : vector<1x384xf32>
    %571 = arith.addf %567, %570 : vector<1x384xf32>
    %c29_i32 = arith.constant 29 : i32
    %572 = tpu.dynamic_rotate %142 by %c29_i32 dim 1 : vector<1x384xf32>, i32 -> vector<1x384xf32>
    %573 = vector.broadcast %17 : f32 to vector<1x384xf32>
    %574 = arith.mulf %573, %572 : vector<1x384xf32>
    %575 = arith.addf %571, %574 : vector<1x384xf32>
    %c13_i32 = arith.constant 13 : i32
    %576 = tpu.dynamic_rotate %142 by %c13_i32 dim 1 : vector<1x384xf32>, i32 -> vector<1x384xf32>
    %577 = vector.broadcast %24 : f32 to vector<1x384xf32>
    %578 = arith.mulf %577, %576 : vector<1x384xf32>
    %579 = arith.addf %575, %578 : vector<1x384xf32>
    %c381_i32 = arith.constant 381 : i32
    %580 = tpu.dynamic_rotate %142 by %c381_i32 dim 1 : vector<1x384xf32>, i32 -> vector<1x384xf32>
    %581 = vector.broadcast %31 : f32 to vector<1x384xf32>
    %582 = arith.mulf %581, %580 : vector<1x384xf32>
    %583 = arith.addf %579, %582 : vector<1x384xf32>
    %c365_i32 = arith.constant 365 : i32
    %584 = tpu.dynamic_rotate %142 by %c365_i32 dim 1 : vector<1x384xf32>, i32 -> vector<1x384xf32>
    %585 = vector.broadcast %38 : f32 to vector<1x384xf32>
    %586 = arith.mulf %585, %584 : vector<1x384xf32>
    %587 = arith.addf %583, %586 : vector<1x384xf32>
    %c349_i32 = arith.constant 349 : i32
    %588 = tpu.dynamic_rotate %142 by %c349_i32 dim 1 : vector<1x384xf32>, i32 -> vector<1x384xf32>
    %589 = vector.broadcast %45 : f32 to vector<1x384xf32>
    %590 = arith.mulf %589, %588 : vector<1x384xf32>
    %591 = arith.addf %587, %590 : vector<1x384xf32>
    %c333_i32 = arith.constant 333 : i32
    %592 = tpu.dynamic_rotate %142 by %c333_i32 dim 1 : vector<1x384xf32>, i32 -> vector<1x384xf32>
    %593 = vector.broadcast %52 : f32 to vector<1x384xf32>
    %594 = arith.mulf %593, %592 : vector<1x384xf32>
    %595 = arith.addf %591, %594 : vector<1x384xf32>
    %c45_i32_111 = arith.constant 45 : i32
    %596 = tpu.dynamic_rotate %144 by %c45_i32_111 dim 1 : vector<1x384xf32>, i32 -> vector<1x384xf32>
    %597 = vector.broadcast %59 : f32 to vector<1x384xf32>
    %598 = arith.mulf %597, %596 : vector<1x384xf32>
    %599 = arith.addf %595, %598 : vector<1x384xf32>
    %c29_i32_112 = arith.constant 29 : i32
    %600 = tpu.dynamic_rotate %144 by %c29_i32_112 dim 1 : vector<1x384xf32>, i32 -> vector<1x384xf32>
    %601 = vector.broadcast %66 : f32 to vector<1x384xf32>
    %602 = arith.mulf %601, %600 : vector<1x384xf32>
    %603 = arith.addf %599, %602 : vector<1x384xf32>
    %c13_i32_113 = arith.constant 13 : i32
    %604 = tpu.dynamic_rotate %144 by %c13_i32_113 dim 1 : vector<1x384xf32>, i32 -> vector<1x384xf32>
    %605 = vector.broadcast %73 : f32 to vector<1x384xf32>
    %606 = arith.mulf %605, %604 : vector<1x384xf32>
    %607 = arith.addf %603, %606 : vector<1x384xf32>
    %c381_i32_114 = arith.constant 381 : i32
    %608 = tpu.dynamic_rotate %144 by %c381_i32_114 dim 1 : vector<1x384xf32>, i32 -> vector<1x384xf32>
    %609 = vector.broadcast %80 : f32 to vector<1x384xf32>
    %610 = arith.mulf %609, %608 : vector<1x384xf32>
    %611 = arith.addf %607, %610 : vector<1x384xf32>
    %c365_i32_115 = arith.constant 365 : i32
    %612 = tpu.dynamic_rotate %144 by %c365_i32_115 dim 1 : vector<1x384xf32>, i32 -> vector<1x384xf32>
    %613 = vector.broadcast %87 : f32 to vector<1x384xf32>
    %614 = arith.mulf %613, %612 : vector<1x384xf32>
    %615 = arith.addf %611, %614 : vector<1x384xf32>
    %c349_i32_116 = arith.constant 349 : i32
    %616 = tpu.dynamic_rotate %144 by %c349_i32_116 dim 1 : vector<1x384xf32>, i32 -> vector<1x384xf32>
    %617 = vector.broadcast %94 : f32 to vector<1x384xf32>
    %618 = arith.mulf %617, %616 : vector<1x384xf32>
    %619 = arith.addf %615, %618 : vector<1x384xf32>
    %c333_i32_117 = arith.constant 333 : i32
    %620 = tpu.dynamic_rotate %144 by %c333_i32_117 dim 1 : vector<1x384xf32>, i32 -> vector<1x384xf32>
    %621 = vector.broadcast %101 : f32 to vector<1x384xf32>
    %622 = arith.mulf %621, %620 : vector<1x384xf32>
    %623 = arith.addf %619, %622 : vector<1x384xf32>
    %cst_118 = arith.constant 0.000000e+00 : f32
    %624 = vector.broadcast %cst_118 : f32 to vector<1x384xf32>
    %625 = arith.select %566, %623, %624 : vector<1x384xi1>, vector<1x384xf32>
    %626 = arith.addf %557, %625 : vector<1x384xf32>
    %627 = vector.broadcast %2 : f32 to vector<1x384xf32>
    %628 = arith.mulf %626, %627 : vector<1x384xf32>
    %629 = vector.broadcast %3 : f32 to vector<1x384xf32>
    %630 = arith.addf %628, %629 : vector<1x384xf32>
    %cst_119 = arith.constant 0.000000e+00 : f32
    %631 = vector.broadcast %cst_119 : f32 to vector<1x384xf32>
    %632 = arith.maximumf %630, %631 : vector<1x384xf32>
    %cst_120 = arith.constant 0.000000e+00 : f32
    %633 = vector.broadcast %cst_120 : f32 to vector<1x384xf32>
    %634 = arith.subf %633, %632 : vector<1x384xf32>
    %635 = math.exp %634 : vector<1x384xf32>
    %cst_121 = arith.constant 1.000000e+00 : f32
    %636 = vector.broadcast %cst_121 : f32 to vector<1x384xf32>
    %637 = arith.addf %636, %635 : vector<1x384xf32>
    %cst_122 = arith.constant 1.000000e+00 : f32
    %638 = vector.broadcast %cst_122 : f32 to vector<1x384xf32>
    %639 = arith.divf %638, %637 : vector<1x384xf32>
    %640 = vector.extract_strided_slice %639 {offsets = [0, 0], sizes = [1, 256], strides = [1, 1]} : vector<1x384xf32> to vector<1x256xf32>
    %c0_i32_123 = arith.constant 0 : i32
    %c4_i32_124 = arith.constant 4 : i32
    %641 = arith.muli %c0_i32_123, %c4_i32_124 : i32
    %642 = tpu.assume_multiple %641, 4 : i32
    %643 = arith.index_cast %c0_i32_9 : i32 to index
    %644 = arith.index_cast %642 : i32 to index
    %c0_125 = arith.constant 0 : index
    %645 = vector.load %arg1[%643, %644, %c0_125] : memref<1x4x256xf32, #tpu.memory_space<vmem>>, vector<1x4x256xf32>
    %646 = vector.shape_cast %645 : vector<1x4x256xf32> to vector<4x256xf32>
    %647 = vector.broadcast %640 : vector<1x256xf32> to vector<4x256xf32>
    %648 = arith.mulf %646, %647 : vector<4x256xf32>
    %649 = arith.index_cast %c0_i32_9 : i32 to index
    %650 = arith.index_cast %642 : i32 to index
    %c0_126 = arith.constant 0 : index
    %651 = vector.load %arg4[%649, %650, %c0_126] : memref<1x4x256xf32, #tpu.memory_space<vmem>>, vector<1x4x256xf32>
    %652 = vector.shape_cast %651 : vector<1x4x256xf32> to vector<4x256xf32>
    %653 = vector.shape_cast %648 : vector<4x256xf32> to vector<1x4x256xf32>
    tpu.vector_store %arg4[%649, %650, %c0_126], %653 {strides = array<i32>} : memref<1x4x256xf32, #tpu.memory_space<vmem>>, vector<1x4x256xf32>,
    %c1_i32_127 = arith.constant 1 : i32
    %c1_i32_128 = arith.constant 1 : i32
    return
  }
  func.func @transform_0(%arg0: i32) -> (i32, i32, i32) {
    %c0_i32 = arith.constant 0 : i32
    %c0_i32_0 = arith.constant 0 : i32
    %c0_i32_1 = arith.constant 0 : i32
    return %arg0, %c0_i32, %c0_i32_0 : i32, i32, i32
  }
  func.func @transform_1(%arg0: i32) -> i32 {
    %c0_i32 = arith.constant 0 : i32
    %c0_i32_0 = arith.constant 0 : i32
    return %c0_i32 : i32
  }
  func.func @transform_2(%arg0: i32) -> i32 {
    %c0_i32 = arith.constant 0 : i32
    %c0_i32_0 = arith.constant 0 : i32
    return %c0_i32 : i32
  }
  func.func @transform_3(%arg0: i32) -> (i32, i32, i32) {
    %c0_i32 = arith.constant 0 : i32
    %c0_i32_0 = arith.constant 0 : i32
    %c0_i32_1 = arith.constant 0 : i32
    return %arg0, %c0_i32, %c0_i32_0 : i32, i32, i32
  }
}

</mosaic_0001>

<llo_original>
// kernel: tpu_custom_call.1
$region0: #{tpu_custom_call.1}
  #allocation0 [shape = 'u32[]', space=smem, size = 0x4, offset = 0x4, fixed_abs, tag = 'smem constant byte address 0x4 - core index']
  #allocation1 [shape = 'u32[144,128]{1,0:T(1,128)}', space=vmem, size = 0x12000, scoped, tag = 'internal scratch']
  #allocation2 [shape = 'f32[2,1,384]{2,1,0:T(1,128)}', space=vmem, size = 0xc00, scoped, tag = 'scratch operand']
  %s0 = inlined_call_operand.hbm [shape: f32[2,4,256], index: 0, kind: input, shape index: {}]
  %s1 = inlined_call_operand.vmem [shape: f32[98], index: 1, kind: input, shape index: {}]
  %s2 = inlined_call_operand.vmem [shape: f32[2], index: 2, kind: input, shape index: {}]
  %s3 = inlined_call_operand.hbm [shape: f32[2,4,256], index: 3, kind: output, shape index: {}]
  %s4 = sld [smem:[#allocation0]]
  $region57: #{tpu_custom_call.1} parent=0
    _
  %s6 = ssub.s32 1, %s4
  %s7 = scalar_select 0, %s6, %s4
  $region1: #{tpu_custom_call.1} parent=0
    #allocation3 [shape = 'u8[8192]{0}', space=vmem, size = 0x2000, scoped, tag = 'input window, operand 0']
    #allocation4 [shape = 's32[2]{0}', space=sflag, size = 0x8, scoped, tag = 'scoped memory for tpu_custom_call.1']
    #allocation5 [shape = 's32[2]{0}', space=sflag, size = 0x8, scoped, tag = 'scoped memory for tpu_custom_call.1']
    #allocation6 [shape = 's32[2]{0}', space=sflag, size = 0x8, scoped, tag = 'scoped memory for tpu_custom_call.1']
    #allocation7 [shape = 'u8[512]{0}', space=smem, size = 0x200, scoped, tag = 'input window, operand 1, single buffered']
    #allocation8 [shape = 'u8[512]{0}', space=smem, size = 0x200, scoped, tag = 'input window, operand 2, single buffered']
    #allocation9 [shape = 's32[1]{0}', space=sflag, size = 0x4, scoped, tag = 'scoped memory for tpu_custom_call.1']
    #allocation10 [shape = 'u8[8192]{0}', space=vmem, size = 0x2000, scoped, tag = 'output window, operand 0']
    %8 = vsyncpa [#allocation4], 0
    %s9 = scalar_lea.sflag [#allocation4], 1
    %10 = vsyncpa %s9, 0
    %11 = vsyncpa [#allocation6], 0
    %12 = vsyncpa [#allocation9], 0
    %13 = vsyncpa [#allocation5], 0
    %s14 = scalar_lea.sflag [#allocation5], 1
    %15 = vsyncpa %s14, 0
    loop: start=0, step=1, limit=4
    $region2: #{tpu_custom_call.1} parent=1 // loop_pre_header
      _
    $region3: #{tpu_custom_call.1} parent=1 // loop_header
      %s17 = sphi 0, %s21
      %p18 = scmp.ge.s32.totalorder %s17, 4
      %s27 = sphi 0, %s29
      %s30 = sphi 0, %s27
      %s31 = sphi 0, %s30
      %s47 = sphi 0, %s31
      %s51 = sphi 0, %s51
      %s53 = sphi 0, %s51
      %s54 = sphi 0, %s53
      %s68 = sphi 0, %s54
      %s72 = sphi 0, %s72
      %s74 = sphi 0, %s72
      %s75 = sphi 0, %s74
      %s89 = sphi 0, %s75
      %s95 = sphi 0, %s97
      %s98 = sphi 0, %s95
      %s99 = sphi 0, %s98
      %s115 = sphi 0, %s99
    $region4: #{tpu_custom_call.1} parent=1 // loop_header_branch
      %20 = sbr.rel (%p18) target = $region8
    $region5: #{tpu_custom_call.1} parent=1 // loop_body
      %s22 = ssub.s32 %s17, 1
      %s23 = ssub.s32 %s17, 2
      %s24 = sadd.s32 %s17, 1
      %s25 = ssub.s32 %s17, %s24
      %p26 = scmp.eq.s32.totalorder %s25, 0
      %s28 = sadd.s32 %s27, 1
      %s29 = scalar_select %p26, %s27, %s28
      %p32 = pneg %p26
      %p33 = scmp.eq.s32.totalorder %s17, 1
      %p34 = por %p32, %p33
      %p35 = scmp.ne.s32.totalorder %s27, %s30
      %p36 = scmp.eq.s32.totalorder %s17, 0
      %p37 = por %p35, %p36
      %p38 = scmp.ne.s32.totalorder %s27, %s30
      %p39 = scmp.eq.s32.totalorder %s22, 1
      %p40 = por %p38, %p39
      %p41 = scmp.ne.s32.totalorder %s30, %s31
      %p42 = scmp.eq.s32.totalorder %s22, 0
      %p43 = por %p41, %p42
      %p44 = scmp.ne.s32.totalorder %s30, %s31
      %p45 = scmp.eq.s32.totalorder %s23, 1
      %p46 = por %p44, %p45
      %p48 = scmp.ne.s32.totalorder %s31, %s47
      %p49 = scmp.eq.s32.totalorder %s23, 0
      %p50 = por %p48, %p49
      %s52 = sadd.s32 %s51, 1
      %p55 = scmp.eq.s32.totalorder %s17, 1
      %p56 = scmp.ne.s32.totalorder %s51, %s53
      %p57 = scmp.eq.s32.totalorder %s17, 0
      %p58 = por %p56, %p57
      %p59 = scmp.ne.s32.totalorder %s51, %s53
      %p60 = scmp.eq.s32.totalorder %s22, 1
      %p61 = por %p59, %p60
      %p62 = scmp.ne.s32.totalorder %s53, %s54
      %p63 = scmp.eq.s32.totalorder %s22, 0
      %p64 = por %p62, %p63
      %p65 = scmp.ne.s32.totalorder %s53, %s54
      %p66 = scmp.eq.s32.totalorder %s23, 1
      %p67 = por %p65, %p66
      %p69 = scmp.ne.s32.totalorder %s54, %s68
      %p70 = scmp.eq.s32.totalorder %s23, 0
      %p71 = por %p69, %p70
      %s73 = sadd.s32 %s72, 1
      %p76 = scmp.eq.s32.totalorder %s17, 1
      %p77 = scmp.ne.s32.totalorder %s72, %s74
      %p78 = scmp.eq.s32.totalorder %s17, 0
      %p79 = por %p77, %p78
      %p80 = scmp.ne.s32.totalorder %s72, %s74
      %p81 = scmp.eq.s32.totalorder %s22, 1
      %p82 = por %p80, %p81
      %p83 = scmp.ne.s32.totalorder %s74, %s75
      %p84 = scmp.eq.s32.totalorder %s22, 0
      %p85 = por %p83, %p84
      %p86 = scmp.ne.s32.totalorder %s74, %s75
      %p87 = scmp.eq.s32.totalorder %s23, 1
      %p88 = por %p86, %p87
      %p90 = scmp.ne.s32.totalorder %s75, %s89
      %p91 = scmp.eq.s32.totalorder %s23, 0
      %p92 = por %p90, %p91
      %s93 = ssub.s32 %s17, %s24
      %p94 = scmp.eq.s32.totalorder %s93, 0
      %s96 = sadd.s32 %s95, 1
      %s97 = scalar_select %p94, %s95, %s96
      %p100 = pneg %p94
      %p101 = scmp.eq.s32.totalorder %s17, 1
      %p102 = por %p100, %p101
      %p103 = scmp.ne.s32.totalorder %s95, %s98
      %p104 = scmp.eq.s32.totalorder %s17, 0
      %p105 = por %p103, %p104
      %p106 = scmp.ne.s32.totalorder %s95, %s98
      %p107 = scmp.eq.s32.totalorder %s22, 1
      %p108 = por %p106, %p107
      %p109 = scmp.ne.s32.totalorder %s98, %s99
      %p110 = scmp.eq.s32.totalorder %s22, 0
      %p111 = por %p109, %p110
      %p112 = scmp.ne.s32.totalorder %s98, %s99
      %p113 = scmp.eq.s32.totalorder %s23, 1
      %p114 = por %p112, %p113
      %p116 = scmp.ne.s32.totalorder %s99, %s115
      %p117 = scmp.eq.s32.totalorder %s23, 0
      %p118 = por %p116, %p117
      %p119 = scmp.le.s32.totalorder 1, %s17
      %p120 = scmp.lt.s32.totalorder %s17, 3
      %p121 = pnand %p119, %p120
      %p122 = pneg %p121
      // Predicated region
      $region9: #{tpu_custom_call.1} parent=5 // pred_check
        _
      $region10: #{tpu_custom_call.1} parent=5 // pred_check_branch
        %124 = sbr.rel (%p121) target = $region12
      $region11: #{tpu_custom_call.1} parent=5 // pred_region
        %s125 = ssub.s32 %s17, 1
        // Predicated region
        $region13: #{tpu_custom_call.1} parent=11 // pred_check
          %p126 = pneg %p64
        $region14: #{tpu_custom_call.1} parent=11 // pred_check_branch
          %128 = sbr.rel (%p126) target = $region16
        $region15: #{tpu_custom_call.1} parent=11 // pred_region
          %s130 = ssub.s32 16, 16
          %131 = vsyncadd [#allocation6], %s130
          %s133 = sshll.u32 %s1, 4
          %s134 = int_to_ptr.vmem [resolvable:$true] %s133
          %136 = dma.vmem_to_smem %s134, 16, [#allocation7], [#allocation6]
        $region16: #{tpu_custom_call.1} parent=11 // pred_fallthru
          _
        // Predicated region
        $region17: #{tpu_custom_call.1} parent=11 // pred_check
          %p137 = pneg %p85
        $region18: #{tpu_custom_call.1} parent=11 // pred_check_branch
          %139 = sbr.rel (%p137) target = $region20
        $region19: #{tpu_custom_call.1} parent=11 // pred_region
          %s141 = ssub.s32 16, 16
          %142 = vsyncadd [#allocation9], %s141
          %s144 = sshll.u32 %s2, 4
          %s145 = int_to_ptr.vmem [resolvable:$true] %s144
          %147 = dma.vmem_to_smem %s145, 16, [#allocation8], [#allocation9]
        $region20: #{tpu_custom_call.1} parent=11 // pred_fallthru
          _
      $region12: #{tpu_custom_call.1} parent=5 // pred_fallthru
        _
      %p148 = scmp.lt.s32.totalorder %s17, 2
      // Predicated region
      $region21: #{tpu_custom_call.1} parent=5 // pred_check
        %p149 = pneg %p148
      $region22: #{tpu_custom_call.1} parent=5 // pred_check_branch
        %151 = sbr.rel (%p149) target = $region24
      $region23: #{tpu_custom_call.1} parent=5 // pred_region
        // Predicated region
        $region25: #{tpu_custom_call.1} parent=23 // pred_check
          %p152 = pneg %p37
        $region26: #{tpu_custom_call.1} parent=23 // pred_check_branch
          %154 = sbr.rel (%p152) target = $region28
        $region27: #{tpu_custom_call.1} parent=23 // pred_region
          %s155 = sand.u32 %s27, 1
          %s156 = scalar_lea.sflag [#allocation4], %s155
          %s157 = sand.u32 %s27, 1
          %s158 = smul.addr %s157, 8
          %s159 = scalar_lea.vmem [#allocation3], %s158
          %s161 = ssub.s32 128, 128
          %162 = vsyncadd %s156, %s161
          %s163 = smul.addr %s17, 2
          %s164 = smul.addr %s163, 64
          %s165 = scalar_lea.hbm %s0, %s164
          %s167 = sshll.u32 %s159, 4
          %s168 = int_to_ptr.vmem [resolvable:$true] %s167
          %170 = dma.hbm_to_vmem [thread:$0]  %s165, 128, %s168, %s156
        $region28: #{tpu_custom_call.1} parent=23 // pred_fallthru
          _
      $region24: #{tpu_custom_call.1} parent=5 // pred_fallthru
        _
      %p171 = scmp.le.s32.totalorder 1, %s17
      %p172 = scmp.lt.s32.totalorder %s17, 3
      %p173 = pnand %p171, %p172
      %p174 = pneg %p173
      // Predicated region
      $region29: #{tpu_custom_call.1} parent=5 // pred_check
        _
      $region30: #{tpu_custom_call.1} parent=5 // pred_check_branch
        %176 = sbr.rel (%p173) target = $region32
      $region31: #{tpu_custom_call.1} parent=5 // pred_region
        %s177 = ssub.s32 %s17, 1
        %s178 = sand.u32 %s30, 1
        %s179 = scalar_lea.sflag [#allocation4], %s178
        %s180 = sand.u32 %s30, 1
        %s181 = smul.addr %s180, 8
        %s182 = scalar_lea.vmem [#allocation3], %s181
        // Predicated region
        $region33: #{tpu_custom_call.1} parent=31 // pred_check
          %p183 = pneg %p43
        $region34: #{tpu_custom_call.1} parent=31 // pred_check_branch
          %185 = sbr.rel (%p183) target = $region36
        $region35: #{tpu_custom_call.1} parent=31 // pred_region
          %186 = dma.done %s179, 128
        $region36: #{tpu_custom_call.1} parent=31 // pred_fallthru
          _
        // Predicated region
        $region37: #{tpu_custom_call.1} parent=31 // pred_check
          %p187 = pneg %p64
        $region38: #{tpu_custom_call.1} parent=31 // pred_check_branch
          %189 = sbr.rel (%p187) target = $region40
        $region39: #{tpu_custom_call.1} parent=31 // pred_region
          %190 = dma.done [#allocation6], 16
        $region40: #{tpu_custom_call.1} parent=31 // pred_fallthru
          _
        // Predicated region
        $region41: #{tpu_custom_call.1} parent=31 // pred_check
          %p191 = pneg %p85
        $region42: #{tpu_custom_call.1} parent=31 // pred_check_branch
          %193 = sbr.rel (%p191) target = $region44
        $region43: #{tpu_custom_call.1} parent=31 // pred_region
          %194 = dma.done [#allocation9], 16
        $region44: #{tpu_custom_call.1} parent=31 // pred_fallthru
          _
        %195 = sfence
        %s196 = sand.u32 %s30, 1
        %s197 = scalar_lea.sflag [#allocation4], %s196
        %s198 = sand.u32 %s30, 1
        %s199 = smul.addr %s198, 8
        %s200 = scalar_lea.vmem [#allocation3], %s199
        %p201 = pneg %p43
        %p202 = pneg %p40
        %p203 = pneg %p64
        %p204 = pneg %p61
        %p205 = pneg %p85
        %p206 = pneg %p82
        %p207 = pneg %p111
        %p208 = pneg %p108
        %s209 = sand.u32 %s98, 1
        %s210 = scalar_lea.sflag [#allocation5], %s209
        %s211 = sand.u32 %s98, 1
        %s212 = smul.addr %s211, 8
        %s213 = scalar_lea.vmem [#allocation10], %s212
        %v214 = vlaneseq
        %vm215 = vcmp.ge.s32.totalorder %v214, 0
        %vm216 = vcmp.lt.s32.totalorder %v214, 384
        %vm217 = vmand %vm215, %vm216
        %218 = vst.msk [vmem:[#allocation2] sm:$0x7] %vm217, 0.0
        %219 = vst.msk [vmem:[#allocation2 + $0x3] sm:$0x7] %vm217, 0.0
        %s220 = sld [smem:[#allocation8]]
        %s221 = sld [smem:[#allocation8 + $0x1]]
        %s222 = sld [smem:[#allocation7]]
        %s223 = sld [smem:[#allocation7 + $0x1]]
        %s224 = sld [smem:[#allocation7 + $0x2]]
        %s225 = sld [smem:[#allocation7 + $0x3]]
        %s226 = sld [smem:[#allocation7 + $0x4]]
        %s227 = sld [smem:[#allocation7 + $0x5]]
        %s228 = sld [smem:[#allocation7 + $0x6]]
        %s229 = sld [smem:[#allocation7 + $0x7]]
        %s230 = sld [smem:[#allocation7 + $0x8]]
        %s231 = sld [smem:[#allocation7 + $0x9]]
        %s232 = sld [smem:[#allocation7 + $0xa]]
        %s233 = sld [smem:[#allocation7 + $0xb]]
        %s234 = sld [smem:[#allocation7 + $0xc]]
        %s235 = sld [smem:[#allocation7 + $0xd]]
        %s236 = sld [smem:[#allocation7 + $0xe]]
        %s237 = sld [smem:[#allocation7 + $0xf]]
        %s238 = sld [smem:[#allocation7 + $0x10]]
        %s239 = sld [smem:[#allocation7 + $0x11]]
        %s240 = sld [smem:[#allocation7 + $0x12]]
        %s241 = sld [smem:[#allocation7 + $0x13]]
        %s242 = sld [smem:[#allocation7 + $0x14]]
        %s243 = sld [smem:[#allocation7 + $0x15]]
        %s244 = sld [smem:[#allocation7 + $0x16]]
        %s245 = sld [smem:[#allocation7 + $0x17]]
        %s246 = sld [smem:[#allocation7 + $0x18]]
        %s247 = sld [smem:[#allocation7 + $0x19]]
        %s248 = sld [smem:[#allocation7 + $0x1a]]
        %s249 = sld [smem:[#allocation7 + $0x1b]]
        %s250 = sld [smem:[#allocation7 + $0x1c]]
        %s251 = sld [smem:[#allocation7 + $0x1d]]
        %s252 = sld [smem:[#allocation7 + $0x1e]]
        %s253 = sld [smem:[#allocation7 + $0x1f]]
        %s254 = sld [smem:[#allocation7 + $0x20]]
        %s255 = sld [smem:[#allocation7 + $0x21]]
        %s256 = sld [smem:[#allocation7 + $0x22]]
        %s257 = sld [smem:[#allocation7 + $0x23]]
        %s258 = sld [smem:[#allocation7 + $0x24]]
        %s259 = sld [smem:[#allocation7 + $0x25]]
        %s260 = sld [smem:[#allocation7 + $0x26]]
        %s261 = sld [smem:[#allocation7 + $0x27]]
        %s262 = sld [smem:[#allocation7 + $0x28]]
        %s263 = sld [smem:[#allocation7 + $0x29]]
        %s264 = sld [smem:[#allocation7 + $0x2a]]
        %s265 = sld [smem:[#allocation7 + $0x2b]]
        %s266 = sld [smem:[#allocation7 + $0x2c]]
        %s267 = sld [smem:[#allocation7 + $0x2d]]
        %s268 = sld [smem:[#allocation7 + $0x2e]]
        %s269 = sld [smem:[#allocation7 + $0x2f]]
        %s270 = sld [smem:[#allocation7 + $0x30]]
        %s271 = sld [smem:[#allocation7 + $0x31]]
        %s272 = sld [smem:[#allocation7 + $0x32]]
        %s273 = sld [smem:[#allocation7 + $0x33]]
        %s274 = sld [smem:[#allocation7 + $0x34]]
        %s275 = sld [smem:[#allocation7 + $0x35]]
        %s276 = sld [smem:[#allocation7 + $0x36]]
        %s277 = sld [smem:[#allocation7 + $0x37]]
        %s278 = sld [smem:[#allocation7 + $0x38]]
        %s279 = sld [smem:[#allocation7 + $0x39]]
        %s280 = sld [smem:[#allocation7 + $0x3a]]
        %s281 = sld [smem:[#allocation7 + $0x3b]]
        %s282 = sld [smem:[#allocation7 + $0x3c]]
        %s283 = sld [smem:[#allocation7 + $0x3d]]
        %s284 = sld [smem:[#allocation7 + $0x3e]]
        %s285 = sld [smem:[#allocation7 + $0x3f]]
        %s286 = sld [smem:[#allocation7 + $0x40]]
        %s287 = sld [smem:[#allocation7 + $0x41]]
        %s288 = sld [smem:[#allocation7 + $0x42]]
        %s289 = sld [smem:[#allocation7 + $0x43]]
        %s290 = sld [smem:[#allocation7 + $0x44]]
        %s291 = sld [smem:[#allocation7 + $0x45]]
        %s292 = sld [smem:[#allocation7 + $0x46]]
        %s293 = sld [smem:[#allocation7 + $0x47]]
        %s294 = sld [smem:[#allocation7 + $0x48]]
        %s295 = sld [smem:[#allocation7 + $0x49]]
        %s296 = sld [smem:[#allocation7 + $0x4a]]
        %s297 = sld [smem:[#allocation7 + $0x4b]]
        %s298 = sld [smem:[#allocation7 + $0x4c]]
        %s299 = sld [smem:[#allocation7 + $0x4d]]
        %s300 = sld [smem:[#allocation7 + $0x4e]]
        %s301 = sld [smem:[#allocation7 + $0x4f]]
        %s302 = sld [smem:[#allocation7 + $0x50]]
        %s303 = sld [smem:[#allocation7 + $0x51]]
        %s304 = sld [smem:[#allocation7 + $0x52]]
        %s305 = sld [smem:[#allocation7 + $0x53]]
        %s306 = sld [smem:[#allocation7 + $0x54]]
        %s307 = sld [smem:[#allocation7 + $0x55]]
        %s308 = sld [smem:[#allocation7 + $0x56]]
        %s309 = sld [smem:[#allocation7 + $0x57]]
        %s310 = sld [smem:[#allocation7 + $0x58]]
        %s311 = sld [smem:[#allocation7 + $0x59]]
        %s312 = sld [smem:[#allocation7 + $0x5a]]
        %s313 = sld [smem:[#allocation7 + $0x5b]]
        %s314 = sld [smem:[#allocation7 + $0x5c]]
        %s315 = sld [smem:[#allocation7 + $0x5d]]
        %s316 = sld [smem:[#allocation7 + $0x5e]]
        %s317 = sld [smem:[#allocation7 + $0x5f]]
        %s318 = sld [smem:[#allocation7 + $0x60]]
        %s319 = sld [smem:[#allocation7 + $0x61]]
        %v320 = vlaneseq
        %v321 = vand.u32 %v320, 127
        %v322 = vadd.s32 %v321, 128
        %vm323 = vcmp.lt.s32.totalorder %v321, 0
        %v324 = vsub.s32 0, %v321
        %v325 = vsel %vm323, %v324, %v321
        %v326 = vshrl.u32 %v325, 4
        %v327 = vand.u32 %v325, 15
        %v328 = vsub.s32 0, %v327
        %v329 = vsel %vm323, %v328, %v327
        %vm330 = vcmp.lt.s32.totalorder %v322, 0
        %v331 = vsub.s32 0, %v322
        %v332 = vsel %vm330, %v331, %v322
        %v333 = vshrl.u32 %v332, 4
        %v334 = vand.u32 %v332, 15
        %v335 = vsub.s32 0, %v334
        %v336 = vsel %vm330, %v335, %v334
        %vm337 = vcmp.ne.s32.totalorder %v329, 0
        %vm338 = vcmp.ne.s32.totalorder %v336, 0
        %vm339 = vcmp.lt.s32.totalorder %v329, 0
        %vm340 = vcmp.lt.s32.totalorder %v336, 0
        %vm341 = vmand %vm339, %vm337
        %vm342 = vmand %vm340, %vm338
        %v343 = vadd.s32 %v329, 16
        %v344 = vadd.s32 %v336, 16
        %v345 = vsel %vm341, %v343, %v329
        %v346 = vsel %vm342, %v344, %v336
        %s347 = smul.u32 0, 2
        %s348 = smul.addr %s347, 4
        %s349 = scalar_lea.vmem %s182, %s348 [#allocation3]
        %v350 = vld [vmem:[%s349] sm:$0xff]
        %v352 = vcombine.high %v350, %v350
        %vm354 = vcmask 1043456
        %v355 = vsel %vm354, %v350, -inf
        %v356 = vrot.slane %v355, 4
        %v357 = vmax.f32 %v355, %v356
        %v358 = vrot.slane %v357, 2
        %v359 = vmax.f32 %v357, %v358
        %v360 = vrot.slane %v359, 1
        %v361 = vmax.f32 %v359, %v360
        %v362 = vsel %vm354, %v352, -inf
        %v363 = vrot.slane %v362, 4
        %v364 = vmax.f32 %v362, %v363
        %v365 = vrot.slane %v364, 2
        %v366 = vmax.f32 %v364, %v365
        %v367 = vrot.slane %v366, 1
        %v368 = vmax.f32 %v366, %v367
        %v369 = vsel %vm354, %v350, 0.0
        %v370 = vrot.slane %v369, 4
        %v371 = vadd.f32 %v369, %v370
        %v372 = vrot.slane %v371, 2
        %v373 = vadd.f32 %v371, %v372
        %v374 = vrot.slane %v373, 1
        %v375 = vadd.f32 %v373, %v374
        %v376 = vsel %vm354, %v352, 0.0
        %v377 = vrot.slane %v376, 4
        %v378 = vadd.f32 %v376, %v377
        %v379 = vrot.slane %v378, 2
        %v380 = vadd.f32 %v378, %v379
        %v381 = vrot.slane %v380, 1
        %v382 = vadd.f32 %v380, %v381
        %v383 = vadd.f32 %v375, 0.0
        %v384 = vadd.f32 %v382, 0.0
        %v385 = vmul.f32 %v383, 0.25
        %v386 = vmul.f32 %v384, 0.25
        %v389 = vcombine.low %v361, %v368
        %v391 = vunpack.c.l.s4 1966171168
        %v392 = vunpack.c.0.s8 %v391
        %v393 = vlaneseq
        %v394 = vshrl.u32 %v393, 7
        %v395 = vsub.s32 %v392, %v394
        %v396 = vrot.slane %v389, %v395
        %v398 = vunpack.c.l.s4 1966171168
        %v399 = vunpack.c.0.s8 %v398
        %v400 = vlaneseq
        %v401 = vshrl.u32 %v400, 7
        %v402 = vsub.s32 %v399, %v401
        %v403 = vrot.slane %v396, %v402
        %vm405 = vcmp.lt.s32.totalorder %v214, 256
        %vm406 = vmand %vm215, %vm405
        %407 = vst.msk [vmem:[#allocation2] sm:$0x3] %vm406, %v403
        %v410 = vcombine.low %v385, %v386
        %v412 = vunpack.c.l.s4 1966171168
        %v413 = vunpack.c.0.s8 %v412
        %v414 = vlaneseq
        %v415 = vshrl.u32 %v414, 7
        %v416 = vsub.s32 %v413, %v415
        %v417 = vrot.slane %v410, %v416
        %v419 = vunpack.c.l.s4 1966171168
        %v420 = vunpack.c.0.s8 %v419
        %v421 = vlaneseq
        %v422 = vshrl.u32 %v421, 7
        %v423 = vsub.s32 %v420, %v422
        %v424 = vrot.slane %v417, %v423
        %s426 = scalar_lea.vmem [#allocation2], 3
        %427 = vst.msk [vmem:[%s426] sm:$0x3] %vm406, %v424
        %v428 = vld [vmem:[#allocation2] sm:$0x7]
        %v429 = vld [vmem:[%s426] sm:$0x7]
        %v430 = vadd.s32 %v345, 4294967293
        %v431 = vadd.s32 %v346, 4294967293
        %vm432 = vcmp.ge.s32.totalorder %v430, 0
        %vm433 = vcmp.ge.s32.totalorder %v431, 0
        %vm434 = vcmp.lt.s32.totalorder %v430, 16
        %vm435 = vcmp.lt.s32.totalorder %v431, 16
        %vm436 = vmand %vm432, %vm434
        %vm437 = vmand %vm433, %vm435
        %v439 = vlaneseq
        %v440 = vshrl.u32 %v439, 7
        %v441 = vsub.s32 0, %v440
        %v442 = vrot.slane %v428, %v441
        %v443 = vlaneseq
        %v444 = vshrl.u32 %v443, 7
        %v445 = vsub.s32 1, %v444
        %v446 = vrot.slane %v428, %v445
        %v447 = vlaneseq
        %v448 = vshrl.u32 %v447, 7
        %v449 = vsub.s32 2, %v448
        %v450 = vrot.slane %v428, %v449
        %454 = vrot.lane.b32.xlu0 %v442, 51
        %v455 = vpop.permute.xlu0 %454
        %456 = vrot.lane.b32.xlu0 %v446, 51
        %v457 = vpop.permute.xlu0 %456
        %458 = vrot.lane.b32.xlu0 %v450, 51
        %v459 = vpop.permute.xlu0 %458
        %vm460 = vcmp.lt.s32.totalorder %v321, 51
        %v461 = vsel %vm460, %v455, %v457
        %v462 = vsel %vm460, %v459, %v455
        %v463 = vstv %s222
        %v464 = vmul.f32 %v463, %v462
        %v465 = vmul.f32 %v463, %v461
        %v466 = vadd.f32 %v464, 0.0
        %v467 = vadd.f32 %v465, 0.0
        %468 = vrot.lane.b32.xlu0 %v442, 35
        %v469 = vpop.permute.xlu0 %468
        %470 = vrot.lane.b32.xlu0 %v446, 35
        %v471 = vpop.permute.xlu0 %470
        %472 = vrot.lane.b32.xlu0 %v450, 35
        %v473 = vpop.permute.xlu0 %472
        %vm474 = vcmp.lt.s32.totalorder %v321, 35
        %v475 = vsel %vm474, %v469, %v471
        %v476 = vsel %vm474, %v473, %v469
        %v477 = vstv %s229
        %v478 = vmul.f32 %v477, %v476
        %v479 = vmul.f32 %v477, %v475
        %v480 = vadd.f32 %v466, %v478
        %v481 = vadd.f32 %v467, %v479
        %482 = vrot.lane.b32.xlu0 %v442, 19
        %v483 = vpop.permute.xlu0 %482
        %484 = vrot.lane.b32.xlu0 %v446, 19
        %v485 = vpop.permute.xlu0 %484
        %486 = vrot.lane.b32.xlu0 %v450, 19
        %v487 = vpop.permute.xlu0 %486
        %vm488 = vcmp.lt.s32.totalorder %v321, 19
        %v489 = vsel %vm488, %v483, %v485
        %v490 = vsel %vm488, %v487, %v483
        %v491 = vstv %s236
        %v492 = vmul.f32 %v491, %v490
        %v493 = vmul.f32 %v491, %v489
        %v494 = vadd.f32 %v480, %v492
        %v495 = vadd.f32 %v481, %v493
        %496 = vrot.lane.b32.xlu0 %v442, 3
        %v497 = vpop.permute.xlu0 %496
        %498 = vrot.lane.b32.xlu0 %v446, 3
        %v499 = vpop.permute.xlu0 %498
        %500 = vrot.lane.b32.xlu0 %v450, 3
        %v501 = vpop.permute.xlu0 %500
        %vm502 = vcmp.lt.s32.totalorder %v321, 3
        %v503 = vsel %vm502, %v497, %v499
        %v504 = vsel %vm502, %v501, %v497
        %v505 = vstv %s243
        %v506 = vmul.f32 %v505, %v504
        %v507 = vmul.f32 %v505, %v503
        %v508 = vadd.f32 %v494, %v506
        %v509 = vadd.f32 %v495, %v507
        %510 = vrot.lane.b32.xlu0 %v442, 115
        %v511 = vpop.permute.xlu0 %510
        %512 = vrot.lane.b32.xlu0 %v446, 115
        %v513 = vpop.permute.xlu0 %512
        %514 = vrot.lane.b32.xlu0 %v450, 115
        %v515 = vpop.permute.xlu0 %514
        %vm516 = vcmp.lt.s32.totalorder %v321, 115
        %v517 = vsel %vm516, %v513, %v515
        %v518 = vsel %vm516, %v511, %v513
        %v519 = vstv %s250
        %v520 = vmul.f32 %v519, %v518
        %v521 = vmul.f32 %v519, %v517
        %v522 = vadd.f32 %v508, %v520
        %v523 = vadd.f32 %v509, %v521
        %524 = vrot.lane.b32.xlu0 %v442, 99
        %v525 = vpop.permute.xlu0 %524
        %526 = vrot.lane.b32.xlu0 %v446, 99
        %v527 = vpop.permute.xlu0 %526
        %528 = vrot.lane.b32.xlu0 %v450, 99
        %v529 = vpop.permute.xlu0 %528
        %vm530 = vcmp.lt.s32.totalorder %v321, 99
        %v531 = vsel %vm530, %v527, %v529
        %v532 = vsel %vm530, %v525, %v527
        %v533 = vstv %s257
        %v534 = vmul.f32 %v533, %v532
        %v535 = vmul.f32 %v533, %v531
        %v536 = vadd.f32 %v522, %v534
        %v537 = vadd.f32 %v523, %v535
        %538 = vrot.lane.b32.xlu0 %v442, 83
        %v539 = vpop.permute.xlu0 %538
        %540 = vrot.lane.b32.xlu0 %v446, 83
        %v541 = vpop.permute.xlu0 %540
        %542 = vrot.lane.b32.xlu0 %v450, 83
        %v543 = vpop.permute.xlu0 %542
        %vm544 = vcmp.lt.s32.totalorder %v321, 83
        %v545 = vsel %vm544, %v541, %v543
        %v546 = vsel %vm544, %v539, %v541
        %v547 = vstv %s264
        %v548 = vmul.f32 %v547, %v546
        %v549 = vmul.f32 %v547, %v545
        %v550 = vadd.f32 %v536, %v548
        %v551 = vadd.f32 %v537, %v549
        %v553 = vlaneseq
        %v554 = vshrl.u32 %v553, 7
        %v555 = vsub.s32 0, %v554
        %v556 = vrot.slane %v429, %v555
        %v557 = vlaneseq
        %v558 = vshrl.u32 %v557, 7
        %v559 = vsub.s32 1, %v558
        %v560 = vrot.slane %v429, %v559
        %v561 = vlaneseq
        %v562 = vshrl.u32 %v561, 7
        %v563 = vsub.s32 2, %v562
        %v564 = vrot.slane %v429, %v563
        %568 = vrot.lane.b32.xlu0 %v556, 51
        %v569 = vpop.permute.xlu0 %568
        %570 = vrot.lane.b32.xlu0 %v560, 51
        %v571 = vpop.permute.xlu0 %570
        %572 = vrot.lane.b32.xlu0 %v564, 51
        %v573 = vpop.permute.xlu0 %572
        %v574 = vsel %vm460, %v569, %v571
        %v575 = vsel %vm460, %v573, %v569
        %v576 = vstv %s271
        %v577 = vmul.f32 %v576, %v575
        %v578 = vmul.f32 %v576, %v574
        %v579 = vadd.f32 %v550, %v577
        %v580 = vadd.f32 %v551, %v578
        %581 = vrot.lane.b32.xlu0 %v556, 35
        %v582 = vpop.permute.xlu0 %581
        %583 = vrot.lane.b32.xlu0 %v560, 35
        %v584 = vpop.permute.xlu0 %583
        %585 = vrot.lane.b32.xlu0 %v564, 35
        %v586 = vpop.permute.xlu0 %585
        %v587 = vsel %vm474, %v582, %v584
        %v588 = vsel %vm474, %v586, %v582
        %v589 = vstv %s278
        %v590 = vmul.f32 %v589, %v588
        %v591 = vmul.f32 %v589, %v587
        %v592 = vadd.f32 %v579, %v590
        %v593 = vadd.f32 %v580, %v591
        %594 = vrot.lane.b32.xlu0 %v556, 19
        %v595 = vpop.permute.xlu0 %594
        %596 = vrot.lane.b32.xlu0 %v560, 19
        %v597 = vpop.permute.xlu0 %596
        %598 = vrot.lane.b32.xlu0 %v564, 19
        %v599 = vpop.permute.xlu0 %598
        %v600 = vsel %vm488, %v595, %v597
        %v601 = vsel %vm488, %v599, %v595
        %v602 = vstv %s285
        %v603 = vmul.f32 %v602, %v601
        %v604 = vmul.f32 %v602, %v600
        %v605 = vadd.f32 %v592, %v603
        %v606 = vadd.f32 %v593, %v604
        %607 = vrot.lane.b32.xlu0 %v556, 3
        %v608 = vpop.permute.xlu0 %607
        %609 = vrot.lane.b32.xlu0 %v560, 3
        %v610 = vpop.permute.xlu0 %609
        %611 = vrot.lane.b32.xlu0 %v564, 3
        %v612 = vpop.permute.xlu0 %611
        %v613 = vsel %vm502, %v608, %v610
        %v614 = vsel %vm502, %v612, %v608
        %v615 = vstv %s292
        %v616 = vmul.f32 %v615, %v614
        %v617 = vmul.f32 %v615, %v613
        %v618 = vadd.f32 %v605, %v616
        %v619 = vadd.f32 %v606, %v617
        %620 = vrot.lane.b32.xlu0 %v556, 115
        %v621 = vpop.permute.xlu0 %620
        %622 = vrot.lane.b32.xlu0 %v560, 115
        %v623 = vpop.permute.xlu0 %622
        %624 = vrot.lane.b32.xlu0 %v564, 115
        %v625 = vpop.permute.xlu0 %624
        %v626 = vsel %vm516, %v623, %v625
        %v627 = vsel %vm516, %v621, %v623
        %v628 = vstv %s299
        %v629 = vmul.f32 %v628, %v627
        %v630 = vmul.f32 %v628, %v626
        %v631 = vadd.f32 %v618, %v629
        %v632 = vadd.f32 %v619, %v630
        %633 = vrot.lane.b32.xlu0 %v556, 99
        %v634 = vpop.permute.xlu0 %633
        %635 = vrot.lane.b32.xlu0 %v560, 99
        %v636 = vpop.permute.xlu0 %635
        %637 = vrot.lane.b32.xlu0 %v564, 99
        %v638 = vpop.permute.xlu0 %637
        %v639 = vsel %vm530, %v636, %v638
        %v640 = vsel %vm530, %v634, %v636
        %v641 = vstv %s306
        %v642 = vmul.f32 %v641, %v640
        %v643 = vmul.f32 %v641, %v639
        %v644 = vadd.f32 %v631, %v642
        %v645 = vadd.f32 %v632, %v643
        %646 = vrot.lane.b32.xlu0 %v556, 83
        %v647 = vpop.permute.xlu0 %646
        %648 = vrot.lane.b32.xlu0 %v560, 83
        %v649 = vpop.permute.xlu0 %648
        %650 = vrot.lane.b32.xlu0 %v564, 83
        %v651 = vpop.permute.xlu0 %650
        %v652 = vsel %vm544, %v649, %v651
        %v653 = vsel %vm544, %v647, %v649
        %v654 = vstv %s313
        %v655 = vmul.f32 %v654, %v653
        %v656 = vmul.f32 %v654, %v652
        %v657 = vadd.f32 %v644, %v655
        %v658 = vadd.f32 %v645, %v656
        %v659 = vsel %vm436, %v657, 0.0
        %v660 = vsel %vm437, %v658, 0.0
        %v661 = vadd.f32 %v659, 0.0
        %v662 = vadd.f32 %v660, 0.0
        %v663 = vadd.s32 %v345, 4294967294
        %v664 = vadd.s32 %v346, 4294967294
        %vm665 = vcmp.ge.s32.totalorder %v663, 0
        %vm666 = vcmp.ge.s32.totalorder %v664, 0
        %vm667 = vcmp.lt.s32.totalorder %v663, 16
        %vm668 = vcmp.lt.s32.totalorder %v664, 16
        %vm669 = vmand %vm665, %vm667
        %vm670 = vmand %vm666, %vm668
        %671 = vrot.lane.b32.xlu0 %v442, 50
        %v672 = vpop.permute.xlu0 %671
        %673 = vrot.lane.b32.xlu0 %v446, 50
        %v674 = vpop.permute.xlu0 %673
        %675 = vrot.lane.b32.xlu0 %v450, 50
        %v676 = vpop.permute.xlu0 %675
        %vm677 = vcmp.lt.s32.totalorder %v321, 50
        %v678 = vsel %vm677, %v672, %v674
        %v679 = vsel %vm677, %v676, %v672
        %v680 = vstv %s223
        %v681 = vmul.f32 %v680, %v679
        %v682 = vmul.f32 %v680, %v678
        %v683 = vadd.f32 %v681, 0.0
        %v684 = vadd.f32 %v682, 0.0
        %685 = vrot.lane.b32.xlu0 %v442, 34
        %v686 = vpop.permute.xlu0 %685
        %687 = vrot.lane.b32.xlu0 %v446, 34
        %v688 = vpop.permute.xlu0 %687
        %689 = vrot.lane.b32.xlu0 %v450, 34
        %v690 = vpop.permute.xlu0 %689
        %vm691 = vcmp.lt.s32.totalorder %v321, 34
        %v692 = vsel %vm691, %v686, %v688
        %v693 = vsel %vm691, %v690, %v686
        %v694 = vstv %s230
        %v695 = vmul.f32 %v694, %v693
        %v696 = vmul.f32 %v694, %v692
        %v697 = vadd.f32 %v683, %v695
        %v698 = vadd.f32 %v684, %v696
        %699 = vrot.lane.b32.xlu0 %v442, 18
        %v700 = vpop.permute.xlu0 %699
        %701 = vrot.lane.b32.xlu0 %v446, 18
        %v702 = vpop.permute.xlu0 %701
        %703 = vrot.lane.b32.xlu0 %v450, 18
        %v704 = vpop.permute.xlu0 %703
        %vm705 = vcmp.lt.s32.totalorder %v321, 18
        %v706 = vsel %vm705, %v700, %v702
        %v707 = vsel %vm705, %v704, %v700
        %v708 = vstv %s237
        %v709 = vmul.f32 %v708, %v707
        %v710 = vmul.f32 %v708, %v706
        %v711 = vadd.f32 %v697, %v709
        %v712 = vadd.f32 %v698, %v710
        %713 = vrot.lane.b32.xlu0 %v442, 2
        %v714 = vpop.permute.xlu0 %713
        %715 = vrot.lane.b32.xlu0 %v446, 2
        %v716 = vpop.permute.xlu0 %715
        %717 = vrot.lane.b32.xlu0 %v450, 2
        %v718 = vpop.permute.xlu0 %717
        %vm719 = vcmp.lt.s32.totalorder %v321, 2
        %v720 = vsel %vm719, %v714, %v716
        %v721 = vsel %vm719, %v718, %v714
        %v722 = vstv %s244
        %v723 = vmul.f32 %v722, %v721
        %v724 = vmul.f32 %v722, %v720
        %v725 = vadd.f32 %v711, %v723
        %v726 = vadd.f32 %v712, %v724
        %727 = vrot.lane.b32.xlu0 %v442, 114
        %v728 = vpop.permute.xlu0 %727
        %729 = vrot.lane.b32.xlu0 %v446, 114
        %v730 = vpop.permute.xlu0 %729
        %731 = vrot.lane.b32.xlu0 %v450, 114
        %v732 = vpop.permute.xlu0 %731
        %vm733 = vcmp.lt.s32.totalorder %v321, 114
        %v734 = vsel %vm733, %v730, %v732
        %v735 = vsel %vm733, %v728, %v730
        %v736 = vstv %s251
        %v737 = vmul.f32 %v736, %v735
        %v738 = vmul.f32 %v736, %v734
        %v739 = vadd.f32 %v725, %v737
        %v740 = vadd.f32 %v726, %v738
        %741 = vrot.lane.b32.xlu0 %v442, 98
        %v742 = vpop.permute.xlu0 %741
        %743 = vrot.lane.b32.xlu0 %v446, 98
        %v744 = vpop.permute.xlu0 %743
        %745 = vrot.lane.b32.xlu0 %v450, 98
        %v746 = vpop.permute.xlu0 %745
        %vm747 = vcmp.lt.s32.totalorder %v321, 98
        %v748 = vsel %vm747, %v744, %v746
        %v749 = vsel %vm747, %v742, %v744
        %v750 = vstv %s258
        %v751 = vmul.f32 %v750, %v749
        %v752 = vmul.f32 %v750, %v748
        %v753 = vadd.f32 %v739, %v751
        %v754 = vadd.f32 %v740, %v752
        %755 = vrot.lane.b32.xlu0 %v442, 82
        %v756 = vpop.permute.xlu0 %755
        %757 = vrot.lane.b32.xlu0 %v446, 82
        %v758 = vpop.permute.xlu0 %757
        %759 = vrot.lane.b32.xlu0 %v450, 82
        %v760 = vpop.permute.xlu0 %759
        %vm761 = vcmp.lt.s32.totalorder %v321, 82
        %v762 = vsel %vm761, %v758, %v760
        %v763 = vsel %vm761, %v756, %v758
        %v764 = vstv %s265
        %v765 = vmul.f32 %v764, %v763
        %v766 = vmul.f32 %v764, %v762
        %v767 = vadd.f32 %v753, %v765
        %v768 = vadd.f32 %v754, %v766
        %769 = vrot.lane.b32.xlu0 %v556, 50
        %v770 = vpop.permute.xlu0 %769
        %771 = vrot.lane.b32.xlu0 %v560, 50
        %v772 = vpop.permute.xlu0 %771
        %773 = vrot.lane.b32.xlu0 %v564, 50
        %v774 = vpop.permute.xlu0 %773
        %v775 = vsel %vm677, %v770, %v772
        %v776 = vsel %vm677, %v774, %v770
        %v777 = vstv %s272
        %v778 = vmul.f32 %v777, %v776
        %v779 = vmul.f32 %v777, %v775
        %v780 = vadd.f32 %v767, %v778
        %v781 = vadd.f32 %v768, %v779
        %782 = vrot.lane.b32.xlu0 %v556, 34
        %v783 = vpop.permute.xlu0 %782
        %784 = vrot.lane.b32.xlu0 %v560, 34
        %v785 = vpop.permute.xlu0 %784
        %786 = vrot.lane.b32.xlu0 %v564, 34
        %v787 = vpop.permute.xlu0 %786
        %v788 = vsel %vm691, %v783, %v785
        %v789 = vsel %vm691, %v787, %v783
        %v790 = vstv %s279
        %v791 = vmul.f32 %v790, %v789
        %v792 = vmul.f32 %v790, %v788
        %v793 = vadd.f32 %v780, %v791
        %v794 = vadd.f32 %v781, %v792
        %795 = vrot.lane.b32.xlu0 %v556, 18
        %v796 = vpop.permute.xlu0 %795
        %797 = vrot.lane.b32.xlu0 %v560, 18
        %v798 = vpop.permute.xlu0 %797
        %799 = vrot.lane.b32.xlu0 %v564, 18
        %v800 = vpop.permute.xlu0 %799
        %v801 = vsel %vm705, %v796, %v798
        %v802 = vsel %vm705, %v800, %v796
        %v803 = vstv %s286
        %v804 = vmul.f32 %v803, %v802
        %v805 = vmul.f32 %v803, %v801
        %v806 = vadd.f32 %v793, %v804
        %v807 = vadd.f32 %v794, %v805
        %808 = vrot.lane.b32.xlu0 %v556, 2
        %v809 = vpop.permute.xlu0 %808
        %810 = vrot.lane.b32.xlu0 %v560, 2
        %v811 = vpop.permute.xlu0 %810
        %812 = vrot.lane.b32.xlu0 %v564, 2
        %v813 = vpop.permute.xlu0 %812
        %v814 = vsel %vm719, %v809, %v811
        %v815 = vsel %vm719, %v813, %v809
        %v816 = vstv %s293
        %v817 = vmul.f32 %v816, %v815
        %v818 = vmul.f32 %v816, %v814
        %v819 = vadd.f32 %v806, %v817
        %v820 = vadd.f32 %v807, %v818
        %821 = vrot.lane.b32.xlu0 %v556, 114
        %v822 = vpop.permute.xlu0 %821
        %823 = vrot.lane.b32.xlu0 %v560, 114
        %v824 = vpop.permute.xlu0 %823
        %825 = vrot.lane.b32.xlu0 %v564, 114
        %v826 = vpop.permute.xlu0 %825
        %v827 = vsel %vm733, %v824, %v826
        %v828 = vsel %vm733, %v822, %v824
        %v829 = vstv %s300
        %v830 = vmul.f32 %v829, %v828
        %v831 = vmul.f32 %v829, %v827
        %v832 = vadd.f32 %v819, %v830
        %v833 = vadd.f32 %v820, %v831
        %834 = vrot.lane.b32.xlu0 %v556, 98
        %v835 = vpop.permute.xlu0 %834
        %836 = vrot.lane.b32.xlu0 %v560, 98
        %v837 = vpop.permute.xlu0 %836
        %838 = vrot.lane.b32.xlu0 %v564, 98
        %v839 = vpop.permute.xlu0 %838
        %v840 = vsel %vm747, %v837, %v839
        %v841 = vsel %vm747, %v835, %v837
        %v842 = vstv %s307
        %v843 = vmul.f32 %v842, %v841
        %v844 = vmul.f32 %v842, %v840
        %v845 = vadd.f32 %v832, %v843
        %v846 = vadd.f32 %v833, %v844
        %847 = vrot.lane.b32.xlu0 %v556, 82
        %v848 = vpop.permute.xlu0 %847
        %849 = vrot.lane.b32.xlu0 %v560, 82
        %v850 = vpop.permute.xlu0 %849
        %851 = vrot.lane.b32.xlu0 %v564, 82
        %v852 = vpop.permute.xlu0 %851
        %v853 = vsel %vm761, %v850, %v852
        %v854 = vsel %vm761, %v848, %v850
        %v855 = vstv %s314
        %v856 = vmul.f32 %v855, %v854
        %v857 = vmul.f32 %v855, %v853
        %v858 = vadd.f32 %v845, %v856
        %v859 = vadd.f32 %v846, %v857
        %v860 = vsel %vm669, %v858, 0.0
        %v861 = vsel %vm670, %v859, 0.0
        %v862 = vadd.f32 %v661, %v860
        %v863 = vadd.f32 %v662, %v861
        %v864 = vadd.s32 %v345, 4294967295
        %v865 = vadd.s32 %v346, 4294967295
        %vm866 = vcmp.ge.s32.totalorder %v864, 0
        %vm867 = vcmp.ge.s32.totalorder %v865, 0
        %vm868 = vcmp.lt.s32.totalorder %v864, 16
        %vm869 = vcmp.lt.s32.totalorder %v865, 16
        %vm870 = vmand %vm866, %vm868
        %vm871 = vmand %vm867, %vm869
        %872 = vrot.lane.b32.xlu0 %v442, 49
        %v873 = vpop.permute.xlu0 %872
        %874 = vrot.lane.b32.xlu0 %v446, 49
        %v875 = vpop.permute.xlu0 %874
        %876 = vrot.lane.b32.xlu0 %v450, 49
        %v877 = vpop.permute.xlu0 %876
        %vm878 = vcmp.lt.s32.totalorder %v321, 49
        %v879 = vsel %vm878, %v873, %v875
        %v880 = vsel %vm878, %v877, %v873
        %v881 = vstv %s224
        %v882 = vmul.f32 %v881, %v880
        %v883 = vmul.f32 %v881, %v879
        %v884 = vadd.f32 %v882, 0.0
        %v885 = vadd.f32 %v883, 0.0
        %886 = vrot.lane.b32.xlu0 %v442, 33
        %v887 = vpop.permute.xlu0 %886
        %888 = vrot.lane.b32.xlu0 %v446, 33
        %v889 = vpop.permute.xlu0 %888
        %890 = vrot.lane.b32.xlu0 %v450, 33
        %v891 = vpop.permute.xlu0 %890
        %vm892 = vcmp.lt.s32.totalorder %v321, 33
        %v893 = vsel %vm892, %v887, %v889
        %v894 = vsel %vm892, %v891, %v887
        %v895 = vstv %s231
        %v896 = vmul.f32 %v895, %v894
        %v897 = vmul.f32 %v895, %v893
        %v898 = vadd.f32 %v884, %v896
        %v899 = vadd.f32 %v885, %v897
        %900 = vrot.lane.b32.xlu0 %v442, 17
        %v901 = vpop.permute.xlu0 %900
        %902 = vrot.lane.b32.xlu0 %v446, 17
        %v903 = vpop.permute.xlu0 %902
        %904 = vrot.lane.b32.xlu0 %v450, 17
        %v905 = vpop.permute.xlu0 %904
        %vm906 = vcmp.lt.s32.totalorder %v321, 17
        %v907 = vsel %vm906, %v901, %v903
        %v908 = vsel %vm906, %v905, %v901
        %v909 = vstv %s238
        %v910 = vmul.f32 %v909, %v908
        %v911 = vmul.f32 %v909, %v907
        %v912 = vadd.f32 %v898, %v910
        %v913 = vadd.f32 %v899, %v911
        %914 = vrot.lane.b32.xlu0 %v442, 1
        %v915 = vpop.permute.xlu0 %914
        %916 = vrot.lane.b32.xlu0 %v446, 1
        %v917 = vpop.permute.xlu0 %916
        %918 = vrot.lane.b32.xlu0 %v450, 1
        %v919 = vpop.permute.xlu0 %918
        %vm920 = vcmp.lt.s32.totalorder %v321, 1
        %v921 = vsel %vm920, %v915, %v917
        %v922 = vsel %vm920, %v919, %v915
        %v923 = vstv %s245
        %v924 = vmul.f32 %v923, %v922
        %v925 = vmul.f32 %v923, %v921
        %v926 = vadd.f32 %v912, %v924
        %v927 = vadd.f32 %v913, %v925
        %928 = vrot.lane.b32.xlu0 %v442, 113
        %v929 = vpop.permute.xlu0 %928
        %930 = vrot.lane.b32.xlu0 %v446, 113
        %v931 = vpop.permute.xlu0 %930
        %932 = vrot.lane.b32.xlu0 %v450, 113
        %v933 = vpop.permute.xlu0 %932
        %vm934 = vcmp.lt.s32.totalorder %v321, 113
        %v935 = vsel %vm934, %v931, %v933
        %v936 = vsel %vm934, %v929, %v931
        %v937 = vstv %s252
        %v938 = vmul.f32 %v937, %v936
        %v939 = vmul.f32 %v937, %v935
        %v940 = vadd.f32 %v926, %v938
        %v941 = vadd.f32 %v927, %v939
        %942 = vrot.lane.b32.xlu0 %v442, 97
        %v943 = vpop.permute.xlu0 %942
        %944 = vrot.lane.b32.xlu0 %v446, 97
        %v945 = vpop.permute.xlu0 %944
        %946 = vrot.lane.b32.xlu0 %v450, 97
        %v947 = vpop.permute.xlu0 %946
        %vm948 = vcmp.lt.s32.totalorder %v321, 97
        %v949 = vsel %vm948, %v945, %v947
        %v950 = vsel %vm948, %v943, %v945
        %v951 = vstv %s259
        %v952 = vmul.f32 %v951, %v950
        %v953 = vmul.f32 %v951, %v949
        %v954 = vadd.f32 %v940, %v952
        %v955 = vadd.f32 %v941, %v953
        %956 = vrot.lane.b32.xlu0 %v442, 81
        %v957 = vpop.permute.xlu0 %956
        %958 = vrot.lane.b32.xlu0 %v446, 81
        %v959 = vpop.permute.xlu0 %958
        %960 = vrot.lane.b32.xlu0 %v450, 81
        %v961 = vpop.permute.xlu0 %960
        %vm962 = vcmp.lt.s32.totalorder %v321, 81
        %v963 = vsel %vm962, %v959, %v961
        %v964 = vsel %vm962, %v957, %v959
        %v965 = vstv %s266
        %v966 = vmul.f32 %v965, %v964
        %v967 = vmul.f32 %v965, %v963
        %v968 = vadd.f32 %v954, %v966
        %v969 = vadd.f32 %v955, %v967
        %970 = vrot.lane.b32.xlu0 %v556, 49
        %v971 = vpop.permute.xlu0 %970
        %972 = vrot.lane.b32.xlu0 %v560, 49
        %v973 = vpop.permute.xlu0 %972
        %974 = vrot.lane.b32.xlu0 %v564, 49
        %v975 = vpop.permute.xlu0 %974
        %v976 = vsel %vm878, %v971, %v973
        %v977 = vsel %vm878, %v975, %v971
        %v978 = vstv %s273
        %v979 = vmul.f32 %v978, %v977
        %v980 = vmul.f32 %v978, %v976
        %v981 = vadd.f32 %v968, %v979
        %v982 = vadd.f32 %v969, %v980
        %983 = vrot.lane.b32.xlu0 %v556, 33
        %v984 = vpop.permute.xlu0 %983
        %985 = vrot.lane.b32.xlu0 %v560, 33
        %v986 = vpop.permute.xlu0 %985
        %987 = vrot.lane.b32.xlu0 %v564, 33
        %v988 = vpop.permute.xlu0 %987
        %v989 = vsel %vm892, %v984, %v986
        %v990 = vsel %vm892, %v988, %v984
        %v991 = vstv %s280
        %v992 = vmul.f32 %v991, %v990
        %v993 = vmul.f32 %v991, %v989
        %v994 = vadd.f32 %v981, %v992
        %v995 = vadd.f32 %v982, %v993
        %996 = vrot.lane.b32.xlu0 %v556, 17
        %v997 = vpop.permute.xlu0 %996
        %998 = vrot.lane.b32.xlu0 %v560, 17
        %v999 = vpop.permute.xlu0 %998
        %1000 = vrot.lane.b32.xlu0 %v564, 17
        %v1001 = vpop.permute.xlu0 %1000
        %v1002 = vsel %vm906, %v997, %v999
        %v1003 = vsel %vm906, %v1001, %v997
        %v1004 = vstv %s287
        %v1005 = vmul.f32 %v1004, %v1003
        %v1006 = vmul.f32 %v1004, %v1002
        %v1007 = vadd.f32 %v994, %v1005
        %v1008 = vadd.f32 %v995, %v1006
        %1009 = vrot.lane.b32.xlu0 %v556, 1
        %v1010 = vpop.permute.xlu0 %1009
        %1011 = vrot.lane.b32.xlu0 %v560, 1
        %v1012 = vpop.permute.xlu0 %1011
        %1013 = vrot.lane.b32.xlu0 %v564, 1
        %v1014 = vpop.permute.xlu0 %1013
        %v1015 = vsel %vm920, %v1010, %v1012
        %v1016 = vsel %vm920, %v1014, %v1010
        %v1017 = vstv %s294
        %v1018 = vmul.f32 %v1017, %v1016
        %v1019 = vmul.f32 %v1017, %v1015
        %v1020 = vadd.f32 %v1007, %v1018
        %v1021 = vadd.f32 %v1008, %v1019
        %1022 = vrot.lane.b32.xlu0 %v556, 113
        %v1023 = vpop.permute.xlu0 %1022
        %1024 = vrot.lane.b32.xlu0 %v560, 113
        %v1025 = vpop.permute.xlu0 %1024
        %1026 = vrot.lane.b32.xlu0 %v564, 113
        %v1027 = vpop.permute.xlu0 %1026
        %v1028 = vsel %vm934, %v1025, %v1027
        %v1029 = vsel %vm934, %v1023, %v1025
        %v1030 = vstv %s301
        %v1031 = vmul.f32 %v1030, %v1029
        %v1032 = vmul.f32 %v1030, %v1028
        %v1033 = vadd.f32 %v1020, %v1031
        %v1034 = vadd.f32 %v1021, %v1032
        %1035 = vrot.lane.b32.xlu0 %v556, 97
        %v1036 = vpop.permute.xlu0 %1035
        %1037 = vrot.lane.b32.xlu0 %v560, 97
        %v1038 = vpop.permute.xlu0 %1037
        %1039 = vrot.lane.b32.xlu0 %v564, 97
        %v1040 = vpop.permute.xlu0 %1039
        %v1041 = vsel %vm948, %v1038, %v1040
        %v1042 = vsel %vm948, %v1036, %v1038
        %v1043 = vstv %s308
        %v1044 = vmul.f32 %v1043, %v1042
        %v1045 = vmul.f32 %v1043, %v1041
        %v1046 = vadd.f32 %v1033, %v1044
        %v1047 = vadd.f32 %v1034, %v1045
        %1048 = vrot.lane.b32.xlu0 %v556, 81
        %v1049 = vpop.permute.xlu0 %1048
        %1050 = vrot.lane.b32.xlu0 %v560, 81
        %v1051 = vpop.permute.xlu0 %1050
        %1052 = vrot.lane.b32.xlu0 %v564, 81
        %v1053 = vpop.permute.xlu0 %1052
        %v1054 = vsel %vm962, %v1051, %v1053
        %v1055 = vsel %vm962, %v1049, %v1051
        %v1056 = vstv %s315
        %v1057 = vmul.f32 %v1056, %v1055
        %v1058 = vmul.f32 %v1056, %v1054
        %v1059 = vadd.f32 %v1046, %v1057
        %v1060 = vadd.f32 %v1047, %v1058
        %v1061 = vsel %vm870, %v1059, 0.0
        %v1062 = vsel %vm871, %v1060, 0.0
        %v1063 = vadd.f32 %v862, %v1061
        %v1064 = vadd.f32 %v863, %v1062
        %vm1065 = vcmp.ge.s32.totalorder %v345, 0
        %vm1066 = vcmp.ge.s32.totalorder %v346, 0
        %vm1067 = vcmp.lt.s32.totalorder %v345, 16
        %vm1068 = vcmp.lt.s32.totalorder %v346, 16
        %vm1069 = vmand %vm1065, %vm1067
        %vm1070 = vmand %vm1066, %vm1068
        %1071 = vrot.lane.b32.xlu0 %v442, 48
        %v1072 = vpop.permute.xlu0 %1071
        %1073 = vrot.lane.b32.xlu0 %v446, 48
        %v1074 = vpop.permute.xlu0 %1073
        %1075 = vrot.lane.b32.xlu0 %v450, 48
        %v1076 = vpop.permute.xlu0 %1075
        %vm1077 = vcmp.lt.s32.totalorder %v321, 48
        %v1078 = vsel %vm1077, %v1072, %v1074
        %v1079 = vsel %vm1077, %v1076, %v1072
        %v1080 = vstv %s225
        %v1081 = vmul.f32 %v1080, %v1079
        %v1082 = vmul.f32 %v1080, %v1078
        %v1083 = vadd.f32 %v1081, 0.0
        %v1084 = vadd.f32 %v1082, 0.0
        %1085 = vrot.lane.b32.xlu0 %v442, 32
        %v1086 = vpop.permute.xlu0 %1085
        %1087 = vrot.lane.b32.xlu0 %v446, 32
        %v1088 = vpop.permute.xlu0 %1087
        %1089 = vrot.lane.b32.xlu0 %v450, 32
        %v1090 = vpop.permute.xlu0 %1089
        %vm1091 = vcmp.lt.s32.totalorder %v321, 32
        %v1092 = vsel %vm1091, %v1086, %v1088
        %v1093 = vsel %vm1091, %v1090, %v1086
        %v1094 = vstv %s232
        %v1095 = vmul.f32 %v1094, %v1093
        %v1096 = vmul.f32 %v1094, %v1092
        %v1097 = vadd.f32 %v1083, %v1095
        %v1098 = vadd.f32 %v1084, %v1096
        %1099 = vrot.lane.b32.xlu0 %v442, 16
        %v1100 = vpop.permute.xlu0 %1099
        %1101 = vrot.lane.b32.xlu0 %v446, 16
        %v1102 = vpop.permute.xlu0 %1101
        %1103 = vrot.lane.b32.xlu0 %v450, 16
        %v1104 = vpop.permute.xlu0 %1103
        %vm1105 = vcmp.lt.s32.totalorder %v321, 16
        %v1106 = vsel %vm1105, %v1100, %v1102
        %v1107 = vsel %vm1105, %v1104, %v1100
        %v1108 = vstv %s239
        %v1109 = vmul.f32 %v1108, %v1107
        %v1110 = vmul.f32 %v1108, %v1106
        %v1111 = vadd.f32 %v1097, %v1109
        %v1112 = vadd.f32 %v1098, %v1110
        %v1113 = vstv %s246
        %v1114 = vmul.f32 %v1113, %v428
        %v1116 = vlaneseq
        %v1117 = vshrl.u32 %v1116, 7
        %v1118 = vsub.s32 0, %v1117
        %v1119 = vrot.slane %v1114, %v1118
        %v1120 = vlaneseq
        %v1121 = vshrl.u32 %v1120, 7
        %v1122 = vsub.s32 1, %v1121
        %v1123 = vrot.slane %v1114, %v1122
        %v1126 = vadd.f32 %v1111, %v1119
        %v1127 = vadd.f32 %v1112, %v1123
        %1128 = vrot.lane.b32.xlu0 %v442, 112
        %v1129 = vpop.permute.xlu0 %1128
        %1130 = vrot.lane.b32.xlu0 %v446, 112
        %v1131 = vpop.permute.xlu0 %1130
        %1132 = vrot.lane.b32.xlu0 %v450, 112
        %v1133 = vpop.permute.xlu0 %1132
        %vm1134 = vcmp.lt.s32.totalorder %v321, 112
        %v1135 = vsel %vm1134, %v1131, %v1133
        %v1136 = vsel %vm1134, %v1129, %v1131
        %v1137 = vstv %s253
        %v1138 = vmul.f32 %v1137, %v1136
        %v1139 = vmul.f32 %v1137, %v1135
        %v1140 = vadd.f32 %v1126, %v1138
        %v1141 = vadd.f32 %v1127, %v1139
        %1142 = vrot.lane.b32.xlu0 %v442, 96
        %v1143 = vpop.permute.xlu0 %1142
        %1144 = vrot.lane.b32.xlu0 %v446, 96
        %v1145 = vpop.permute.xlu0 %1144
        %1146 = vrot.lane.b32.xlu0 %v450, 96
        %v1147 = vpop.permute.xlu0 %1146
        %vm1148 = vcmp.lt.s32.totalorder %v321, 96
        %v1149 = vsel %vm1148, %v1145, %v1147
        %v1150 = vsel %vm1148, %v1143, %v1145
        %v1151 = vstv %s260
        %v1152 = vmul.f32 %v1151, %v1150
        %v1153 = vmul.f32 %v1151, %v1149
        %v1154 = vadd.f32 %v1140, %v1152
        %v1155 = vadd.f32 %v1141, %v1153
        %1156 = vrot.lane.b32.xlu0 %v442, 80
        %v1157 = vpop.permute.xlu0 %1156
        %1158 = vrot.lane.b32.xlu0 %v446, 80
        %v1159 = vpop.permute.xlu0 %1158
        %1160 = vrot.lane.b32.xlu0 %v450, 80
        %v1161 = vpop.permute.xlu0 %1160
        %vm1162 = vcmp.lt.s32.totalorder %v321, 80
        %v1163 = vsel %vm1162, %v1159, %v1161
        %v1164 = vsel %vm1162, %v1157, %v1159
        %v1165 = vstv %s267
        %v1166 = vmul.f32 %v1165, %v1164
        %v1167 = vmul.f32 %v1165, %v1163
        %v1168 = vadd.f32 %v1154, %v1166
        %v1169 = vadd.f32 %v1155, %v1167
        %1170 = vrot.lane.b32.xlu0 %v556, 48
        %v1171 = vpop.permute.xlu0 %1170
        %1172 = vrot.lane.b32.xlu0 %v560, 48
        %v1173 = vpop.permute.xlu0 %1172
        %1174 = vrot.lane.b32.xlu0 %v564, 48
        %v1175 = vpop.permute.xlu0 %1174
        %v1176 = vsel %vm1077, %v1171, %v1173
        %v1177 = vsel %vm1077, %v1175, %v1171
        %v1178 = vstv %s274
        %v1179 = vmul.f32 %v1178, %v1177
        %v1180 = vmul.f32 %v1178, %v1176
        %v1181 = vadd.f32 %v1168, %v1179
        %v1182 = vadd.f32 %v1169, %v1180
        %1183 = vrot.lane.b32.xlu0 %v556, 32
        %v1184 = vpop.permute.xlu0 %1183
        %1185 = vrot.lane.b32.xlu0 %v560, 32
        %v1186 = vpop.permute.xlu0 %1185
        %1187 = vrot.lane.b32.xlu0 %v564, 32
        %v1188 = vpop.permute.xlu0 %1187
        %v1189 = vsel %vm1091, %v1184, %v1186
        %v1190 = vsel %vm1091, %v1188, %v1184
        %v1191 = vstv %s281
        %v1192 = vmul.f32 %v1191, %v1190
        %v1193 = vmul.f32 %v1191, %v1189
        %v1194 = vadd.f32 %v1181, %v1192
        %v1195 = vadd.f32 %v1182, %v1193
        %1196 = vrot.lane.b32.xlu0 %v556, 16
        %v1197 = vpop.permute.xlu0 %1196
        %1198 = vrot.lane.b32.xlu0 %v560, 16
        %v1199 = vpop.permute.xlu0 %1198
        %1200 = vrot.lane.b32.xlu0 %v564, 16
        %v1201 = vpop.permute.xlu0 %1200
        %v1202 = vsel %vm1105, %v1197, %v1199
        %v1203 = vsel %vm1105, %v1201, %v1197
        %v1204 = vstv %s288
        %v1205 = vmul.f32 %v1204, %v1203
        %v1206 = vmul.f32 %v1204, %v1202
        %v1207 = vadd.f32 %v1194, %v1205
        %v1208 = vadd.f32 %v1195, %v1206
        %v1209 = vstv %s295
        %v1210 = vmul.f32 %v1209, %v429
        %v1212 = vlaneseq
        %v1213 = vshrl.u32 %v1212, 7
        %v1214 = vsub.s32 0, %v1213
        %v1215 = vrot.slane %v1210, %v1214
        %v1216 = vlaneseq
        %v1217 = vshrl.u32 %v1216, 7
        %v1218 = vsub.s32 1, %v1217
        %v1219 = vrot.slane %v1210, %v1218
        %v1222 = vadd.f32 %v1207, %v1215
        %v1223 = vadd.f32 %v1208, %v1219
        %1224 = vrot.lane.b32.xlu0 %v556, 112
        %v1225 = vpop.permute.xlu0 %1224
        %1226 = vrot.lane.b32.xlu0 %v560, 112
        %v1227 = vpop.permute.xlu0 %1226
        %1228 = vrot.lane.b32.xlu0 %v564, 112
        %v1229 = vpop.permute.xlu0 %1228
        %v1230 = vsel %vm1134, %v1227, %v1229
        %v1231 = vsel %vm1134, %v1225, %v1227
        %v1232 = vstv %s302
        %v1233 = vmul.f32 %v1232, %v1231
        %v1234 = vmul.f32 %v1232, %v1230
        %v1235 = vadd.f32 %v1222, %v1233
        %v1236 = vadd.f32 %v1223, %v1234
        %1237 = vrot.lane.b32.xlu0 %v556, 96
        %v1238 = vpop.permute.xlu0 %1237
        %1239 = vrot.lane.b32.xlu0 %v560, 96
        %v1240 = vpop.permute.xlu0 %1239
        %1241 = vrot.lane.b32.xlu0 %v564, 96
        %v1242 = vpop.permute.xlu0 %1241
        %v1243 = vsel %vm1148, %v1240, %v1242
        %v1244 = vsel %vm1148, %v1238, %v1240
        %v1245 = vstv %s309
        %v1246 = vmul.f32 %v1245, %v1244
        %v1247 = vmul.f32 %v1245, %v1243
        %v1248 = vadd.f32 %v1235, %v1246
        %v1249 = vadd.f32 %v1236, %v1247
        %1250 = vrot.lane.b32.xlu0 %v556, 80
        %v1251 = vpop.permute.xlu0 %1250
        %1252 = vrot.lane.b32.xlu0 %v560, 80
        %v1253 = vpop.permute.xlu0 %1252
        %1254 = vrot.lane.b32.xlu0 %v564, 80
        %v1255 = vpop.permute.xlu0 %1254
        %v1256 = vsel %vm1162, %v1253, %v1255
        %v1257 = vsel %vm1162, %v1251, %v1253
        %v1258 = vstv %s316
        %v1259 = vmul.f32 %v1258, %v1257
        %v1260 = vmul.f32 %v1258, %v1256
        %v1261 = vadd.f32 %v1248, %v1259
        %v1262 = vadd.f32 %v1249, %v1260
        %v1263 = vsel %vm1069, %v1261, 0.0
        %v1264 = vsel %vm1070, %v1262, 0.0
        %v1265 = vadd.f32 %v1063, %v1263
        %v1266 = vadd.f32 %v1064, %v1264
        %v1267 = vadd.s32 %v345, 1
        %v1268 = vadd.s32 %v346, 1
        %vm1269 = vcmp.ge.s32.totalorder %v1267, 0
        %vm1270 = vcmp.ge.s32.totalorder %v1268, 0
        %vm1271 = vcmp.lt.s32.totalorder %v1267, 16
        %vm1272 = vcmp.lt.s32.totalorder %v1268, 16
        %vm1273 = vmand %vm1269, %vm1271
        %vm1274 = vmand %vm1270, %vm1272
        %1275 = vrot.lane.b32.xlu0 %v442, 47
        %v1276 = vpop.permute.xlu0 %1275
        %1277 = vrot.lane.b32.xlu0 %v446, 47
        %v1278 = vpop.permute.xlu0 %1277
        %1279 = vrot.lane.b32.xlu0 %v450, 47
        %v1280 = vpop.permute.xlu0 %1279
        %vm1281 = vcmp.lt.s32.totalorder %v321, 47
        %v1282 = vsel %vm1281, %v1276, %v1278
        %v1283 = vsel %vm1281, %v1280, %v1276
        %v1284 = vstv %s226
        %v1285 = vmul.f32 %v1284, %v1283
        %v1286 = vmul.f32 %v1284, %v1282
        %v1287 = vadd.f32 %v1285, 0.0
        %v1288 = vadd.f32 %v1286, 0.0
        %1289 = vrot.lane.b32.xlu0 %v442, 31
        %v1290 = vpop.permute.xlu0 %1289
        %1291 = vrot.lane.b32.xlu0 %v446, 31
        %v1292 = vpop.permute.xlu0 %1291
        %1293 = vrot.lane.b32.xlu0 %v450, 31
        %v1294 = vpop.permute.xlu0 %1293
        %vm1295 = vcmp.lt.s32.totalorder %v321, 31
        %v1296 = vsel %vm1295, %v1290, %v1292
        %v1297 = vsel %vm1295, %v1294, %v1290
        %v1298 = vstv %s233
        %v1299 = vmul.f32 %v1298, %v1297
        %v1300 = vmul.f32 %v1298, %v1296
        %v1301 = vadd.f32 %v1287, %v1299
        %v1302 = vadd.f32 %v1288, %v1300
        %1303 = vrot.lane.b32.xlu0 %v442, 15
        %v1304 = vpop.permute.xlu0 %1303
        %1305 = vrot.lane.b32.xlu0 %v446, 15
        %v1306 = vpop.permute.xlu0 %1305
        %1307 = vrot.lane.b32.xlu0 %v450, 15
        %v1308 = vpop.permute.xlu0 %1307
        %vm1309 = vcmp.lt.s32.totalorder %v321, 15
        %v1310 = vsel %vm1309, %v1304, %v1306
        %v1311 = vsel %vm1309, %v1308, %v1304
        %v1312 = vstv %s240
        %v1313 = vmul.f32 %v1312, %v1311
        %v1314 = vmul.f32 %v1312, %v1310
        %v1315 = vadd.f32 %v1301, %v1313
        %v1316 = vadd.f32 %v1302, %v1314
        %1317 = vrot.lane.b32.xlu0 %v442, 127
        %v1318 = vpop.permute.xlu0 %1317
        %1319 = vrot.lane.b32.xlu0 %v446, 127
        %v1320 = vpop.permute.xlu0 %1319
        %1321 = vrot.lane.b32.xlu0 %v450, 127
        %v1322 = vpop.permute.xlu0 %1321
        %vm1323 = vcmp.lt.s32.totalorder %v321, 127
        %v1324 = vsel %vm1323, %v1320, %v1322
        %v1325 = vsel %vm1323, %v1318, %v1320
        %v1326 = vstv %s247
        %v1327 = vmul.f32 %v1326, %v1325
        %v1328 = vmul.f32 %v1326, %v1324
        %v1329 = vadd.f32 %v1315, %v1327
        %v1330 = vadd.f32 %v1316, %v1328
        %1331 = vrot.lane.b32.xlu0 %v442, 111
        %v1332 = vpop.permute.xlu0 %1331
        %1333 = vrot.lane.b32.xlu0 %v446, 111
        %v1334 = vpop.permute.xlu0 %1333
        %1335 = vrot.lane.b32.xlu0 %v450, 111
        %v1336 = vpop.permute.xlu0 %1335
        %vm1337 = vcmp.lt.s32.totalorder %v321, 111
        %v1338 = vsel %vm1337, %v1334, %v1336
        %v1339 = vsel %vm1337, %v1332, %v1334
        %v1340 = vstv %s254
        %v1341 = vmul.f32 %v1340, %v1339
        %v1342 = vmul.f32 %v1340, %v1338
        %v1343 = vadd.f32 %v1329, %v1341
        %v1344 = vadd.f32 %v1330, %v1342
        %1345 = vrot.lane.b32.xlu0 %v442, 95
        %v1346 = vpop.permute.xlu0 %1345
        %1347 = vrot.lane.b32.xlu0 %v446, 95
        %v1348 = vpop.permute.xlu0 %1347
        %1349 = vrot.lane.b32.xlu0 %v450, 95
        %v1350 = vpop.permute.xlu0 %1349
        %vm1351 = vcmp.lt.s32.totalorder %v321, 95
        %v1352 = vsel %vm1351, %v1348, %v1350
        %v1353 = vsel %vm1351, %v1346, %v1348
        %v1354 = vstv %s261
        %v1355 = vmul.f32 %v1354, %v1353
        %v1356 = vmul.f32 %v1354, %v1352
        %v1357 = vadd.f32 %v1343, %v1355
        %v1358 = vadd.f32 %v1344, %v1356
        %1359 = vrot.lane.b32.xlu0 %v442, 79
        %v1360 = vpop.permute.xlu0 %1359
        %1361 = vrot.lane.b32.xlu0 %v446, 79
        %v1362 = vpop.permute.xlu0 %1361
        %1363 = vrot.lane.b32.xlu0 %v450, 79
        %v1364 = vpop.permute.xlu0 %1363
        %vm1365 = vcmp.lt.s32.totalorder %v321, 79
        %v1366 = vsel %vm1365, %v1362, %v1364
        %v1367 = vsel %vm1365, %v1360, %v1362
        %v1368 = vstv %s268
        %v1369 = vmul.f32 %v1368, %v1367
        %v1370 = vmul.f32 %v1368, %v1366
        %v1371 = vadd.f32 %v1357, %v1369
        %v1372 = vadd.f32 %v1358, %v1370
        %1373 = vrot.lane.b32.xlu0 %v556, 47
        %v1374 = vpop.permute.xlu0 %1373
        %1375 = vrot.lane.b32.xlu0 %v560, 47
        %v1376 = vpop.permute.xlu0 %1375
        %1377 = vrot.lane.b32.xlu0 %v564, 47
        %v1378 = vpop.permute.xlu0 %1377
        %v1379 = vsel %vm1281, %v1374, %v1376
        %v1380 = vsel %vm1281, %v1378, %v1374
        %v1381 = vstv %s275
        %v1382 = vmul.f32 %v1381, %v1380
        %v1383 = vmul.f32 %v1381, %v1379
        %v1384 = vadd.f32 %v1371, %v1382
        %v1385 = vadd.f32 %v1372, %v1383
        %1386 = vrot.lane.b32.xlu0 %v556, 31
        %v1387 = vpop.permute.xlu0 %1386
        %1388 = vrot.lane.b32.xlu0 %v560, 31
        %v1389 = vpop.permute.xlu0 %1388
        %1390 = vrot.lane.b32.xlu0 %v564, 31
        %v1391 = vpop.permute.xlu0 %1390
        %v1392 = vsel %vm1295, %v1387, %v1389
        %v1393 = vsel %vm1295, %v1391, %v1387
        %v1394 = vstv %s282
        %v1395 = vmul.f32 %v1394, %v1393
        %v1396 = vmul.f32 %v1394, %v1392
        %v1397 = vadd.f32 %v1384, %v1395
        %v1398 = vadd.f32 %v1385, %v1396
        %1399 = vrot.lane.b32.xlu0 %v556, 15
        %v1400 = vpop.permute.xlu0 %1399
        %1401 = vrot.lane.b32.xlu0 %v560, 15
        %v1402 = vpop.permute.xlu0 %1401
        %1403 = vrot.lane.b32.xlu0 %v564, 15
        %v1404 = vpop.permute.xlu0 %1403
        %v1405 = vsel %vm1309, %v1400, %v1402
        %v1406 = vsel %vm1309, %v1404, %v1400
        %v1407 = vstv %s289
        %v1408 = vmul.f32 %v1407, %v1406
        %v1409 = vmul.f32 %v1407, %v1405
        %v1410 = vadd.f32 %v1397, %v1408
        %v1411 = vadd.f32 %v1398, %v1409
        %1412 = vrot.lane.b32.xlu0 %v556, 127
        %v1413 = vpop.permute.xlu0 %1412
        %1414 = vrot.lane.b32.xlu0 %v560, 127
        %v1415 = vpop.permute.xlu0 %1414
        %1416 = vrot.lane.b32.xlu0 %v564, 127
        %v1417 = vpop.permute.xlu0 %1416
        %v1418 = vsel %vm1323, %v1415, %v1417
        %v1419 = vsel %vm1323, %v1413, %v1415
        %v1420 = vstv %s296
        %v1421 = vmul.f32 %v1420, %v1419
        %v1422 = vmul.f32 %v1420, %v1418
        %v1423 = vadd.f32 %v1410, %v1421
        %v1424 = vadd.f32 %v1411, %v1422
        %1425 = vrot.lane.b32.xlu0 %v556, 111
        %v1426 = vpop.permute.xlu0 %1425
        %1427 = vrot.lane.b32.xlu0 %v560, 111
        %v1428 = vpop.permute.xlu0 %1427
        %1429 = vrot.lane.b32.xlu0 %v564, 111
        %v1430 = vpop.permute.xlu0 %1429
        %v1431 = vsel %vm1337, %v1428, %v1430
        %v1432 = vsel %vm1337, %v1426, %v1428
        %v1433 = vstv %s303
        %v1434 = vmul.f32 %v1433, %v1432
        %v1435 = vmul.f32 %v1433, %v1431
        %v1436 = vadd.f32 %v1423, %v1434
        %v1437 = vadd.f32 %v1424, %v1435
        %1438 = vrot.lane.b32.xlu0 %v556, 95
        %v1439 = vpop.permute.xlu0 %1438
        %1440 = vrot.lane.b32.xlu0 %v560, 95
        %v1441 = vpop.permute.xlu0 %1440
        %1442 = vrot.lane.b32.xlu0 %v564, 95
        %v1443 = vpop.permute.xlu0 %1442
        %v1444 = vsel %vm1351, %v1441, %v1443
        %v1445 = vsel %vm1351, %v1439, %v1441
        %v1446 = vstv %s310
        %v1447 = vmul.f32 %v1446, %v1445
        %v1448 = vmul.f32 %v1446, %v1444
        %v1449 = vadd.f32 %v1436, %v1447
        %v1450 = vadd.f32 %v1437, %v1448
        %1451 = vrot.lane.b32.xlu0 %v556, 79
        %v1452 = vpop.permute.xlu0 %1451
        %1453 = vrot.lane.b32.xlu0 %v560, 79
        %v1454 = vpop.permute.xlu0 %1453
        %1455 = vrot.lane.b32.xlu0 %v564, 79
        %v1456 = vpop.permute.xlu0 %1455
        %v1457 = vsel %vm1365, %v1454, %v1456
        %v1458 = vsel %vm1365, %v1452, %v1454
        %v1459 = vstv %s317
        %v1460 = vmul.f32 %v1459, %v1458
        %v1461 = vmul.f32 %v1459, %v1457
        %v1462 = vadd.f32 %v1449, %v1460
        %v1463 = vadd.f32 %v1450, %v1461
        %v1464 = vsel %vm1273, %v1462, 0.0
        %v1465 = vsel %vm1274, %v1463, 0.0
        %v1466 = vadd.f32 %v1265, %v1464
        %v1467 = vadd.f32 %v1266, %v1465
        %v1468 = vadd.s32 %v345, 2
        %v1469 = vadd.s32 %v346, 2
        %vm1470 = vcmp.ge.s32.totalorder %v1468, 0
        %vm1471 = vcmp.ge.s32.totalorder %v1469, 0
        %vm1472 = vcmp.lt.s32.totalorder %v1468, 16
        %vm1473 = vcmp.lt.s32.totalorder %v1469, 16
        %vm1474 = vmand %vm1470, %vm1472
        %vm1475 = vmand %vm1471, %vm1473
        %1476 = vrot.lane.b32.xlu0 %v442, 46
        %v1477 = vpop.permute.xlu0 %1476
        %1478 = vrot.lane.b32.xlu0 %v446, 46
        %v1479 = vpop.permute.xlu0 %1478
        %1480 = vrot.lane.b32.xlu0 %v450, 46
        %v1481 = vpop.permute.xlu0 %1480
        %vm1482 = vcmp.lt.s32.totalorder %v321, 46
        %v1483 = vsel %vm1482, %v1477, %v1479
        %v1484 = vsel %vm1482, %v1481, %v1477
        %v1485 = vstv %s227
        %v1486 = vmul.f32 %v1485, %v1484
        %v1487 = vmul.f32 %v1485, %v1483
        %v1488 = vadd.f32 %v1486, 0.0
        %v1489 = vadd.f32 %v1487, 0.0
        %1490 = vrot.lane.b32.xlu0 %v442, 30
        %v1491 = vpop.permute.xlu0 %1490
        %1492 = vrot.lane.b32.xlu0 %v446, 30
        %v1493 = vpop.permute.xlu0 %1492
        %1494 = vrot.lane.b32.xlu0 %v450, 30
        %v1495 = vpop.permute.xlu0 %1494
        %vm1496 = vcmp.lt.s32.totalorder %v321, 30
        %v1497 = vsel %vm1496, %v1491, %v1493
        %v1498 = vsel %vm1496, %v1495, %v1491
        %v1499 = vstv %s234
        %v1500 = vmul.f32 %v1499, %v1498
        %v1501 = vmul.f32 %v1499, %v1497
        %v1502 = vadd.f32 %v1488, %v1500
        %v1503 = vadd.f32 %v1489, %v1501
        %1504 = vrot.lane.b32.xlu0 %v442, 14
        %v1505 = vpop.permute.xlu0 %1504
        %1506 = vrot.lane.b32.xlu0 %v446, 14
        %v1507 = vpop.permute.xlu0 %1506
        %1508 = vrot.lane.b32.xlu0 %v450, 14
        %v1509 = vpop.permute.xlu0 %1508
        %vm1510 = vcmp.lt.s32.totalorder %v321, 14
        %v1511 = vsel %vm1510, %v1505, %v1507
        %v1512 = vsel %vm1510, %v1509, %v1505
        %v1513 = vstv %s241
        %v1514 = vmul.f32 %v1513, %v1512
        %v1515 = vmul.f32 %v1513, %v1511
        %v1516 = vadd.f32 %v1502, %v1514
        %v1517 = vadd.f32 %v1503, %v1515
        %1518 = vrot.lane.b32.xlu0 %v442, 126
        %v1519 = vpop.permute.xlu0 %1518
        %1520 = vrot.lane.b32.xlu0 %v446, 126
        %v1521 = vpop.permute.xlu0 %1520
        %1522 = vrot.lane.b32.xlu0 %v450, 126
        %v1523 = vpop.permute.xlu0 %1522
        %vm1524 = vcmp.lt.s32.totalorder %v321, 126
        %v1525 = vsel %vm1524, %v1521, %v1523
        %v1526 = vsel %vm1524, %v1519, %v1521
        %v1527 = vstv %s248
        %v1528 = vmul.f32 %v1527, %v1526
        %v1529 = vmul.f32 %v1527, %v1525
        %v1530 = vadd.f32 %v1516, %v1528
        %v1531 = vadd.f32 %v1517, %v1529
        %1532 = vrot.lane.b32.xlu0 %v442, 110
        %v1533 = vpop.permute.xlu0 %1532
        %1534 = vrot.lane.b32.xlu0 %v446, 110
        %v1535 = vpop.permute.xlu0 %1534
        %1536 = vrot.lane.b32.xlu0 %v450, 110
        %v1537 = vpop.permute.xlu0 %1536
        %vm1538 = vcmp.lt.s32.totalorder %v321, 110
        %v1539 = vsel %vm1538, %v1535, %v1537
        %v1540 = vsel %vm1538, %v1533, %v1535
        %v1541 = vstv %s255
        %v1542 = vmul.f32 %v1541, %v1540
        %v1543 = vmul.f32 %v1541, %v1539
        %v1544 = vadd.f32 %v1530, %v1542
        %v1545 = vadd.f32 %v1531, %v1543
        %1546 = vrot.lane.b32.xlu0 %v442, 94
        %v1547 = vpop.permute.xlu0 %1546
        %1548 = vrot.lane.b32.xlu0 %v446, 94
        %v1549 = vpop.permute.xlu0 %1548
        %1550 = vrot.lane.b32.xlu0 %v450, 94
        %v1551 = vpop.permute.xlu0 %1550
        %vm1552 = vcmp.lt.s32.totalorder %v321, 94
        %v1553 = vsel %vm1552, %v1549, %v1551
        %v1554 = vsel %vm1552, %v1547, %v1549
        %v1555 = vstv %s262
        %v1556 = vmul.f32 %v1555, %v1554
        %v1557 = vmul.f32 %v1555, %v1553
        %v1558 = vadd.f32 %v1544, %v1556
        %v1559 = vadd.f32 %v1545, %v1557
        %1560 = vrot.lane.b32.xlu0 %v442, 78
        %v1561 = vpop.permute.xlu0 %1560
        %1562 = vrot.lane.b32.xlu0 %v446, 78
        %v1563 = vpop.permute.xlu0 %1562
        %1564 = vrot.lane.b32.xlu0 %v450, 78
        %v1565 = vpop.permute.xlu0 %1564
        %vm1566 = vcmp.lt.s32.totalorder %v321, 78
        %v1567 = vsel %vm1566, %v1563, %v1565
        %v1568 = vsel %vm1566, %v1561, %v1563
        %v1569 = vstv %s269
        %v1570 = vmul.f32 %v1569, %v1568
        %v1571 = vmul.f32 %v1569, %v1567
        %v1572 = vadd.f32 %v1558, %v1570
        %v1573 = vadd.f32 %v1559, %v1571
        %1574 = vrot.lane.b32.xlu0 %v556, 46
        %v1575 = vpop.permute.xlu0 %1574
        %1576 = vrot.lane.b32.xlu0 %v560, 46
        %v1577 = vpop.permute.xlu0 %1576
        %1578 = vrot.lane.b32.xlu0 %v564, 46
        %v1579 = vpop.permute.xlu0 %1578
        %v1580 = vsel %vm1482, %v1575, %v1577
        %v1581 = vsel %vm1482, %v1579, %v1575
        %v1582 = vstv %s276
        %v1583 = vmul.f32 %v1582, %v1581
        %v1584 = vmul.f32 %v1582, %v1580
        %v1585 = vadd.f32 %v1572, %v1583
        %v1586 = vadd.f32 %v1573, %v1584
        %1587 = vrot.lane.b32.xlu0 %v556, 30
        %v1588 = vpop.permute.xlu0 %1587
        %1589 = vrot.lane.b32.xlu0 %v560, 30
        %v1590 = vpop.permute.xlu0 %1589
        %1591 = vrot.lane.b32.xlu0 %v564, 30
        %v1592 = vpop.permute.xlu0 %1591
        %v1593 = vsel %vm1496, %v1588, %v1590
        %v1594 = vsel %vm1496, %v1592, %v1588
        %v1595 = vstv %s283
        %v1596 = vmul.f32 %v1595, %v1594
        %v1597 = vmul.f32 %v1595, %v1593
        %v1598 = vadd.f32 %v1585, %v1596
        %v1599 = vadd.f32 %v1586, %v1597
        %1600 = vrot.lane.b32.xlu0 %v556, 14
        %v1601 = vpop.permute.xlu0 %1600
        %1602 = vrot.lane.b32.xlu0 %v560, 14
        %v1603 = vpop.permute.xlu0 %1602
        %1604 = vrot.lane.b32.xlu0 %v564, 14
        %v1605 = vpop.permute.xlu0 %1604
        %v1606 = vsel %vm1510, %v1601, %v1603
        %v1607 = vsel %vm1510, %v1605, %v1601
        %v1608 = vstv %s290
        %v1609 = vmul.f32 %v1608, %v1607
        %v1610 = vmul.f32 %v1608, %v1606
        %v1611 = vadd.f32 %v1598, %v1609
        %v1612 = vadd.f32 %v1599, %v1610
        %1613 = vrot.lane.b32.xlu0 %v556, 126
        %v1614 = vpop.permute.xlu0 %1613
        %1615 = vrot.lane.b32.xlu0 %v560, 126
        %v1616 = vpop.permute.xlu0 %1615
        %1617 = vrot.lane.b32.xlu0 %v564, 126
        %v1618 = vpop.permute.xlu0 %1617
        %v1619 = vsel %vm1524, %v1616, %v1618
        %v1620 = vsel %vm1524, %v1614, %v1616
        %v1621 = vstv %s297
        %v1622 = vmul.f32 %v1621, %v1620
        %v1623 = vmul.f32 %v1621, %v1619
        %v1624 = vadd.f32 %v1611, %v1622
        %v1625 = vadd.f32 %v1612, %v1623
        %1626 = vrot.lane.b32.xlu0 %v556, 110
        %v1627 = vpop.permute.xlu0 %1626
        %1628 = vrot.lane.b32.xlu0 %v560, 110
        %v1629 = vpop.permute.xlu0 %1628
        %1630 = vrot.lane.b32.xlu0 %v564, 110
        %v1631 = vpop.permute.xlu0 %1630
        %v1632 = vsel %vm1538, %v1629, %v1631
        %v1633 = vsel %vm1538, %v1627, %v1629
        %v1634 = vstv %s304
        %v1635 = vmul.f32 %v1634, %v1633
        %v1636 = vmul.f32 %v1634, %v1632
        %v1637 = vadd.f32 %v1624, %v1635
        %v1638 = vadd.f32 %v1625, %v1636
        %1639 = vrot.lane.b32.xlu0 %v556, 94
        %v1640 = vpop.permute.xlu0 %1639
        %1641 = vrot.lane.b32.xlu0 %v560, 94
        %v1642 = vpop.permute.xlu0 %1641
        %1643 = vrot.lane.b32.xlu0 %v564, 94
        %v1644 = vpop.permute.xlu0 %1643
        %v1645 = vsel %vm1552, %v1642, %v1644
        %v1646 = vsel %vm1552, %v1640, %v1642
        %v1647 = vstv %s311
        %v1648 = vmul.f32 %v1647, %v1646
        %v1649 = vmul.f32 %v1647, %v1645
        %v1650 = vadd.f32 %v1637, %v1648
        %v1651 = vadd.f32 %v1638, %v1649
        %1652 = vrot.lane.b32.xlu0 %v556, 78
        %v1653 = vpop.permute.xlu0 %1652
        %1654 = vrot.lane.b32.xlu0 %v560, 78
        %v1655 = vpop.permute.xlu0 %1654
        %1656 = vrot.lane.b32.xlu0 %v564, 78
        %v1657 = vpop.permute.xlu0 %1656
        %v1658 = vsel %vm1566, %v1655, %v1657
        %v1659 = vsel %vm1566, %v1653, %v1655
        %v1660 = vstv %s318
        %v1661 = vmul.f32 %v1660, %v1659
        %v1662 = vmul.f32 %v1660, %v1658
        %v1663 = vadd.f32 %v1650, %v1661
        %v1664 = vadd.f32 %v1651, %v1662
        %v1665 = vsel %vm1474, %v1663, 0.0
        %v1666 = vsel %vm1475, %v1664, 0.0
        %v1667 = vadd.f32 %v1466, %v1665
        %v1668 = vadd.f32 %v1467, %v1666
        %v1669 = vadd.s32 %v345, 3
        %v1670 = vadd.s32 %v346, 3
        %vm1671 = vcmp.ge.s32.totalorder %v1669, 0
        %vm1672 = vcmp.ge.s32.totalorder %v1670, 0
        %vm1673 = vcmp.lt.s32.totalorder %v1669, 16
        %vm1674 = vcmp.lt.s32.totalorder %v1670, 16
        %vm1675 = vmand %vm1671, %vm1673
        %vm1676 = vmand %vm1672, %vm1674
        %1677 = vrot.lane.b32.xlu0 %v442, 45
        %v1678 = vpop.permute.xlu0 %1677
        %1679 = vrot.lane.b32.xlu0 %v446, 45
        %v1680 = vpop.permute.xlu0 %1679
        %1681 = vrot.lane.b32.xlu0 %v450, 45
        %v1682 = vpop.permute.xlu0 %1681
        %vm1683 = vcmp.lt.s32.totalorder %v321, 45
        %v1684 = vsel %vm1683, %v1678, %v1680
        %v1685 = vsel %vm1683, %v1682, %v1678
        %v1686 = vstv %s228
        %v1687 = vmul.f32 %v1686, %v1685
        %v1688 = vmul.f32 %v1686, %v1684
        %v1689 = vadd.f32 %v1687, 0.0
        %v1690 = vadd.f32 %v1688, 0.0
        %1691 = vrot.lane.b32.xlu0 %v442, 29
        %v1692 = vpop.permute.xlu0 %1691
        %1693 = vrot.lane.b32.xlu0 %v446, 29
        %v1694 = vpop.permute.xlu0 %1693
        %1695 = vrot.lane.b32.xlu0 %v450, 29
        %v1696 = vpop.permute.xlu0 %1695
        %vm1697 = vcmp.lt.s32.totalorder %v321, 29
        %v1698 = vsel %vm1697, %v1692, %v1694
        %v1699 = vsel %vm1697, %v1696, %v1692
        %v1700 = vstv %s235
        %v1701 = vmul.f32 %v1700, %v1699
        %v1702 = vmul.f32 %v1700, %v1698
        %v1703 = vadd.f32 %v1689, %v1701
        %v1704 = vadd.f32 %v1690, %v1702
        %1705 = vrot.lane.b32.xlu0 %v442, 13
        %v1706 = vpop.permute.xlu0 %1705
        %1707 = vrot.lane.b32.xlu0 %v446, 13
        %v1708 = vpop.permute.xlu0 %1707
        %1709 = vrot.lane.b32.xlu0 %v450, 13
        %v1710 = vpop.permute.xlu0 %1709
        %vm1711 = vcmp.lt.s32.totalorder %v321, 13
        %v1712 = vsel %vm1711, %v1706, %v1708
        %v1713 = vsel %vm1711, %v1710, %v1706
        %v1714 = vstv %s242
        %v1715 = vmul.f32 %v1714, %v1713
        %v1716 = vmul.f32 %v1714, %v1712
        %v1717 = vadd.f32 %v1703, %v1715
        %v1718 = vadd.f32 %v1704, %v1716
        %1719 = vrot.lane.b32.xlu0 %v442, 125
        %v1720 = vpop.permute.xlu0 %1719
        %1721 = vrot.lane.b32.xlu0 %v446, 125
        %v1722 = vpop.permute.xlu0 %1721
        %1723 = vrot.lane.b32.xlu0 %v450, 125
        %v1724 = vpop.permute.xlu0 %1723
        %vm1725 = vcmp.lt.s32.totalorder %v321, 125
        %v1726 = vsel %vm1725, %v1722, %v1724
        %v1727 = vsel %vm1725, %v1720, %v1722
        %v1728 = vstv %s249
        %v1729 = vmul.f32 %v1728, %v1727
        %v1730 = vmul.f32 %v1728, %v1726
        %v1731 = vadd.f32 %v1717, %v1729
        %v1732 = vadd.f32 %v1718, %v1730
        %1733 = vrot.lane.b32.xlu0 %v442, 109
        %v1734 = vpop.permute.xlu0 %1733
        %1735 = vrot.lane.b32.xlu0 %v446, 109
        %v1736 = vpop.permute.xlu0 %1735
        %1737 = vrot.lane.b32.xlu0 %v450, 109
        %v1738 = vpop.permute.xlu0 %1737
        %vm1739 = vcmp.lt.s32.totalorder %v321, 109
        %v1740 = vsel %vm1739, %v1736, %v1738
        %v1741 = vsel %vm1739, %v1734, %v1736
        %v1742 = vstv %s256
        %v1743 = vmul.f32 %v1742, %v1741
        %v1744 = vmul.f32 %v1742, %v1740
        %v1745 = vadd.f32 %v1731, %v1743
        %v1746 = vadd.f32 %v1732, %v1744
        %1747 = vrot.lane.b32.xlu0 %v442, 93
        %v1748 = vpop.permute.xlu0 %1747
        %1749 = vrot.lane.b32.xlu0 %v446, 93
        %v1750 = vpop.permute.xlu0 %1749
        %1751 = vrot.lane.b32.xlu0 %v450, 93
        %v1752 = vpop.permute.xlu0 %1751
        %vm1753 = vcmp.lt.s32.totalorder %v321, 93
        %v1754 = vsel %vm1753, %v1750, %v1752
        %v1755 = vsel %vm1753, %v1748, %v1750
        %v1756 = vstv %s263
        %v1757 = vmul.f32 %v1756, %v1755
        %v1758 = vmul.f32 %v1756, %v1754
        %v1759 = vadd.f32 %v1745, %v1757
        %v1760 = vadd.f32 %v1746, %v1758
        %1761 = vrot.lane.b32.xlu0 %v442, 77
        %v1762 = vpop.permute.xlu0 %1761
        %1763 = vrot.lane.b32.xlu0 %v446, 77
        %v1764 = vpop.permute.xlu0 %1763
        %1765 = vrot.lane.b32.xlu0 %v450, 77
        %v1766 = vpop.permute.xlu0 %1765
        %vm1767 = vcmp.lt.s32.totalorder %v321, 77
        %v1768 = vsel %vm1767, %v1764, %v1766
        %v1769 = vsel %vm1767, %v1762, %v1764
        %v1770 = vstv %s270
        %v1771 = vmul.f32 %v1770, %v1769
        %v1772 = vmul.f32 %v1770, %v1768
        %v1773 = vadd.f32 %v1759, %v1771
        %v1774 = vadd.f32 %v1760, %v1772
        %1775 = vrot.lane.b32.xlu0 %v556, 45
        %v1776 = vpop.permute.xlu0 %1775
        %1777 = vrot.lane.b32.xlu0 %v560, 45
        %v1778 = vpop.permute.xlu0 %1777
        %1779 = vrot.lane.b32.xlu0 %v564, 45
        %v1780 = vpop.permute.xlu0 %1779
        %v1781 = vsel %vm1683, %v1776, %v1778
        %v1782 = vsel %vm1683, %v1780, %v1776
        %v1783 = vstv %s277
        %v1784 = vmul.f32 %v1783, %v1782
        %v1785 = vmul.f32 %v1783, %v1781
        %v1786 = vadd.f32 %v1773, %v1784
        %v1787 = vadd.f32 %v1774, %v1785
        %1788 = vrot.lane.b32.xlu0 %v556, 29
        %v1789 = vpop.permute.xlu0 %1788
        %1790 = vrot.lane.b32.xlu0 %v560, 29
        %v1791 = vpop.permute.xlu0 %1790
        %1792 = vrot.lane.b32.xlu0 %v564, 29
        %v1793 = vpop.permute.xlu0 %1792
        %v1794 = vsel %vm1697, %v1789, %v1791
        %v1795 = vsel %vm1697, %v1793, %v1789
        %v1796 = vstv %s284
        %v1797 = vmul.f32 %v1796, %v1795
        %v1798 = vmul.f32 %v1796, %v1794
        %v1799 = vadd.f32 %v1786, %v1797
        %v1800 = vadd.f32 %v1787, %v1798
        %1801 = vrot.lane.b32.xlu0 %v556, 13
        %v1802 = vpop.permute.xlu0 %1801
        %1803 = vrot.lane.b32.xlu0 %v560, 13
        %v1804 = vpop.permute.xlu0 %1803
        %1805 = vrot.lane.b32.xlu0 %v564, 13
        %v1806 = vpop.permute.xlu0 %1805
        %v1807 = vsel %vm1711, %v1802, %v1804
        %v1808 = vsel %vm1711, %v1806, %v1802
        %v1809 = vstv %s291
        %v1810 = vmul.f32 %v1809, %v1808
        %v1811 = vmul.f32 %v1809, %v1807
        %v1812 = vadd.f32 %v1799, %v1810
        %v1813 = vadd.f32 %v1800, %v1811
        %1814 = vrot.lane.b32.xlu0 %v556, 125
        %v1815 = vpop.permute.xlu0 %1814
        %1816 = vrot.lane.b32.xlu0 %v560, 125
        %v1817 = vpop.permute.xlu0 %1816
        %1818 = vrot.lane.b32.xlu0 %v564, 125
        %v1819 = vpop.permute.xlu0 %1818
        %v1820 = vsel %vm1725, %v1817, %v1819
        %v1821 = vsel %vm1725, %v1815, %v1817
        %v1822 = vstv %s298
        %v1823 = vmul.f32 %v1822, %v1821
        %v1824 = vmul.f32 %v1822, %v1820
        %v1825 = vadd.f32 %v1812, %v1823
        %v1826 = vadd.f32 %v1813, %v1824
        %1827 = vrot.lane.b32.xlu0 %v556, 109
        %v1828 = vpop.permute.xlu0 %1827
        %1829 = vrot.lane.b32.xlu0 %v560, 109
        %v1830 = vpop.permute.xlu0 %1829
        %1831 = vrot.lane.b32.xlu0 %v564, 109
        %v1832 = vpop.permute.xlu0 %1831
        %v1833 = vsel %vm1739, %v1830, %v1832
        %v1834 = vsel %vm1739, %v1828, %v1830
        %v1835 = vstv %s305
        %v1836 = vmul.f32 %v1835, %v1834
        %v1837 = vmul.f32 %v1835, %v1833
        %v1838 = vadd.f32 %v1825, %v1836
        %v1839 = vadd.f32 %v1826, %v1837
        %1840 = vrot.lane.b32.xlu0 %v556, 93
        %v1841 = vpop.permute.xlu0 %1840
        %1842 = vrot.lane.b32.xlu0 %v560, 93
        %v1843 = vpop.permute.xlu0 %1842
        %1844 = vrot.lane.b32.xlu0 %v564, 93
        %v1845 = vpop.permute.xlu0 %1844
        %v1846 = vsel %vm1753, %v1843, %v1845
        %v1847 = vsel %vm1753, %v1841, %v1843
        %v1848 = vstv %s312
        %v1849 = vmul.f32 %v1848, %v1847
        %v1850 = vmul.f32 %v1848, %v1846
        %v1851 = vadd.f32 %v1838, %v1849
        %v1852 = vadd.f32 %v1839, %v1850
        %1853 = vrot.lane.b32.xlu0 %v556, 77
        %v1854 = vpop.permute.xlu0 %1853
        %1855 = vrot.lane.b32.xlu0 %v560, 77
        %v1856 = vpop.permute.xlu0 %1855
        %1857 = vrot.lane.b32.xlu0 %v564, 77
        %v1858 = vpop.permute.xlu0 %1857
        %v1859 = vsel %vm1767, %v1856, %v1858
        %v1860 = vsel %vm1767, %v1854, %v1856
        %v1861 = vstv %s319
        %v1862 = vmul.f32 %v1861, %v1860
        %v1863 = vmul.f32 %v1861, %v1859
        %v1864 = vadd.f32 %v1851, %v1862
        %v1865 = vadd.f32 %v1852, %v1863
        %v1866 = vsel %vm1675, %v1864, 0.0
        %v1867 = vsel %vm1676, %v1865, 0.0
        %v1868 = vadd.f32 %v1667, %v1866
        %v1869 = vadd.f32 %v1668, %v1867
        %v1870 = vstv %s220
        %v1871 = vmul.f32 %v1868, %v1870
        %v1872 = vmul.f32 %v1869, %v1870
        %v1873 = vstv %s221
        %v1874 = vadd.f32 %v1871, %v1873
        %v1875 = vadd.f32 %v1872, %v1873
        %v1876 = vmax.f32 %v1874, 0.0
        %v1877 = vmax.f32 %v1875, 0.0
        %v1878 = vsub.f32 0.0, %v1876
        %v1879 = vsub.f32 0.0, %v1877
        %v1880 = vmul.f32 %v1878, 1.442695
        %v1881 = vpow.pop %v1880
        %v1882 = vmul.f32 %v1879, 1.442695
        %v1883 = vpow.pop %v1882
        %v1884 = vadd.f32 %v1881, 1.0
        %v1885 = vadd.f32 %v1883, 1.0
        %v1886 = vrcp.pop %v1884
        %v1887 = vmul.f32 1.0, %v1886
        %v1888 = vrcp.pop %v1885
        %v1889 = vmul.f32 1.0, %v1888
        %v1890 = vld [vmem:[%s349] sm:$0xff]
        %v1891 = vlaneseq
        %v1892 = vshrl.u32 %v1891, 7
        %v1893 = vsub.s32 0, %v1892
        %v1894 = vrot.slane %v1887, %v1893
        %v1895 = vlaneseq
        %v1896 = vshrl.u32 %v1895, 7
        %v1897 = vsub.s32 0, %v1896
        %v1898 = vrot.slane %v1889, %v1897
        %v1901 = vcombine.low %v1894, %v1898
        %v1903 = vmul.f32 %v1890, %v1901
        %s1904 = smul.addr %s347, 4
        %s1905 = scalar_lea.vmem %s213, %s1904 [#allocation10]
        %1906 = vst [vmem:[%s1905] sm:$0xff] %v1903
        %s1907 = sand.u32 %s98, 1
        %s1908 = scalar_lea.sflag [#allocation5], %s1907
        %s1909 = sand.u32 %s98, 1
        %s1910 = smul.addr %s1909, 8
        %s1911 = scalar_lea.vmem [#allocation10], %s1910
        // Predicated region
        $region45: #{tpu_custom_call.1} parent=31 // pred_check
          %p1912 = pneg %p108
        $region46: #{tpu_custom_call.1} parent=31 // pred_check_branch
          %1914 = sbr.rel (%p1912) target = $region48
        $region47: #{tpu_custom_call.1} parent=31 // pred_region
          %s1916 = ssub.s32 128, 128
          %1917 = vsyncadd %s1908, %s1916
          %s1918 = smul.addr %s22, 2
          %s1919 = smul.addr %s1918, 64
          %s1920 = scalar_lea.hbm %s3, %s1919
          %s1922 = sshll.u32 %s1911, 4
          %s1923 = int_to_ptr.vmem [resolvable:$true] %s1922
          %1925 = dma.vmem_to_hbm [thread:$0]  %s1923, 128, %s1920, %s1908
        $region48: #{tpu_custom_call.1} parent=31 // pred_fallthru
          _
      $region32: #{tpu_custom_call.1} parent=5 // pred_fallthru
        _
      %p1926 = scmp.le.s32.totalorder 2, %s17
      // Predicated region
      $region49: #{tpu_custom_call.1} parent=5 // pred_check
        %p1927 = pneg %p1926
      $region50: #{tpu_custom_call.1} parent=5 // pred_check_branch
        %1929 = sbr.rel (%p1927) target = $region52
      $region51: #{tpu_custom_call.1} parent=5 // pred_region
        %s1930 = ssub.s32 %s17, 2
        // Predicated region
        $region53: #{tpu_custom_call.1} parent=51 // pred_check
          %p1931 = pneg %p114
        $region54: #{tpu_custom_call.1} parent=51 // pred_check_branch
          %1933 = sbr.rel (%p1931) target = $region56
        $region55: #{tpu_custom_call.1} parent=51 // pred_region
          %s1934 = sand.u32 %s99, 1
          %s1935 = scalar_lea.sflag [#allocation5], %s1934
          %s1936 = sand.u32 %s99, 1
          %s1937 = smul.addr %s1936, 8
          %s1938 = scalar_lea.vmem [#allocation10], %s1937
          %1939 = dma.done %s1935, 128
        $region56: #{tpu_custom_call.1} parent=51 // pred_fallthru
          _
      $region52: #{tpu_custom_call.1} parent=5 // pred_fallthru
        _
    $region6: #{tpu_custom_call.1} parent=1 // loop_footer
      %s21 = sadd.s32 1, %s17
    $region7: #{tpu_custom_call.1} parent=1 // loop_footer_branch
      %16 = sbr.rel target = $region3
    $region8: #{tpu_custom_call.1} parent=1 // loop_exit
      _
    %1940 = vsyncpa [#allocation4], 1
    %s1941 = scalar_lea.sflag [#allocation4], 1
    %1942 = vsyncpa %s1941, 1
    %1943 = vsyncpa [#allocation5], 1
    %s1944 = scalar_lea.sflag [#allocation5], 1
    %1945 = vsyncpa %s1944, 1
    %1946 = vsyncpa [#allocation6], 1
    %s1947 = scalar_lea.sflag [#allocation6], 1
    %1948 = vsyncpa %s1947, 1
    %1949 = vsyncpa [#allocation9], 1

</llo_original>
